<compile_context>
chip_gen: v7x
topology: tpu7x:2x2x1
jax: 0.10.0
libtpu: 0.0.40
codegen_flags: <defaults>
</compile_context>

<pallas_src>
import jax
import jax.numpy as jnp
from jax.experimental import pallas as pl
from jax.experimental.pallas import tpu as pltpu


K_PAD = 128          # first-layer K (=100) zero-padded to the 128-lane tile
NEG_SLOPE = 0.2


def _round_up(n, m):
    return ((n + m - 1) // m) * m


def _leaky_relu(x, slope=NEG_SLOPE):
    return jnp.where(x >= 0, x, slope * x)


def discriminator_kernel(x_ref,
                         w1_ref, b1_ref,
                         w2_ref, b2_ref,
                         w3_ref, b3_ref,
                         w4_ref, b4_ref,
                         o_ref):
    # x tile: (TILE_B, 128) bf16.  Weights: bf16 (MXU inputs).  Biases: f32 (VPU).
    # All matmuls accumulate in f32 on the MXU; activations stay in f32 on the VPU.
    h = jnp.dot(x_ref[...], w1_ref[...], preferred_element_type=jnp.float32)
    h = _leaky_relu(h + b1_ref[...])

    h = jnp.dot(h.astype(jnp.bfloat16), w2_ref[...],
                preferred_element_type=jnp.float32)
    h = _leaky_relu(h + b2_ref[...])

    h = jnp.dot(h.astype(jnp.bfloat16), w3_ref[...],
                preferred_element_type=jnp.float32)
    h = _leaky_relu(h + b3_ref[...])

    # Final 256 -> 1 layer: broadcast multiply (VPU) + lane reduction (XLU)
    # instead of an N=1 MXU matmul -> frees the MXU pipeline for the next tile.
    z = jnp.sum(h * w4_ref[...], axis=-1, keepdims=True) + b4_ref[...]

    # Sigmoid: exp + approximate reciprocal both ride the EUP slot.
    o_ref[...] = pl.reciprocal(1.0 + jnp.exp(-z), approx=True).astype(o_ref.dtype)


def init_params(key):
    """Deterministic init mimicking nn.Linear default (U(-1/sqrt(fan_in), 1/sqrt(fan_in))).
    Weights stored transposed as (in_features, out_features), biases as (1, out_features)."""
    dims = [(100, 256), (256, 512), (512, 256), (256, 1)]
    params = {}
    keys = jax.random.split(key, 2 * len(dims))
    for i, (fan_in, fan_out) in enumerate(dims):
        bound = 1.0 / jnp.sqrt(float(fan_in))
        w = jax.random.uniform(keys[2 * i], (fan_in, fan_out),
                               minval=-bound, maxval=bound, dtype=jnp.float32)
        b = jax.random.uniform(keys[2 * i + 1], (1, fan_out),
                               minval=-bound, maxval=bound, dtype=jnp.float32)
        params[f"w{i + 1}"] = w
        params[f"b{i + 1}"] = b
    return params


def prepare_params(params):
    """One-time conversion into kernel layout: w1 K-padded to 128, matmul weights cast to
    bf16 (done once, not per grid step), w4 kept f32 as a (1, 256) row for the VPU path."""
    f_in = params["w1"].shape[0]
    w1 = jnp.pad(params["w1"], ((0, K_PAD - f_in), (0, 0)))
    return {
        "w1": w1.astype(jnp.bfloat16),
        "w2": params["w2"].astype(jnp.bfloat16),
        "w3": params["w3"].astype(jnp.bfloat16),
        "w4": params["w4"].reshape(1, -1).astype(jnp.float32),   # (1, 256), VPU path
        "b1": params["b1"].astype(jnp.float32),
        "b2": params["b2"].astype(jnp.float32),
        "b3": params["b3"].astype(jnp.float32),
        "b4": params["b4"].astype(jnp.float32),                  # (1, 1)
    }


def discriminator_forward(x, prepped, tile_b=512):
    """x: (B, 100) float32.  prepped: output of prepare_params.  Returns (B, 1) float32."""
    B, F = x.shape
    assert F <= K_PAD

    # Batch tile: multiple of 128 (MXU/lane friendly), capped at tile_b (default 512).
    # Largest live intermediate is TILE_B x 512 f32 = 1 MiB at TILE_B=512; with bf16 weights
    # (~0.6 MiB) and double-buffered x tiles this sits far below the 16/32 MiB scoped VMEM
    # defaults on v5e/v6e/v7x, so no vmem_limit_bytes override is needed.
    tb = min(tile_b, _round_up(max(B, 8), 128))
    b_pad = _round_up(B, tb)

    x_p = jnp.pad(x, ((0, b_pad - B), (0, K_PAD - F))).astype(jnp.bfloat16)

    tiled = lambda i: (i, 0)       # x / output: new batch tile every grid step
    resident = lambda i: (0, 0)    # weights/biases: same block index -> stay in VMEM

    in_specs = [
        pl.BlockSpec((tb, K_PAD), tiled),
        pl.BlockSpec(prepped["w1"].shape, resident),
        pl.BlockSpec(prepped["b1"].shape, resident),
        pl.BlockSpec(prepped["w2"].shape, resident),
        pl.BlockSpec(prepped["b2"].shape, resident),
        pl.BlockSpec(prepped["w3"].shape, resident),
        pl.BlockSpec(prepped["b3"].shape, resident),
        pl.BlockSpec(prepped["w4"].shape, resident),
        pl.BlockSpec(prepped["b4"].shape, resident),
    ]

    out = pl.pallas_call(
        discriminator_kernel,
        out_shape=jax.ShapeDtypeStruct((b_pad, 1), jnp.float32),
        grid=(b_pad // tb,),
        in_specs=in_specs,
        out_specs=pl.BlockSpec((tb, 1), tiled),
        compiler_params=pltpu.CompilerParams(
            dimension_semantics=("parallel",),   # shard batch tiles across TCs (v7x megacore)
        ),
    )(x_p,
      prepped["w1"], prepped["b1"],
      prepped["w2"], prepped["b2"],
      prepped["w3"], prepped["b3"],
      prepped["w4"], prepped["b4"])

    return out[:B]


def reference_forward(x, params):
    """Pure-JAX reference with the same bf16-matmul-input / f32-accumulate numerics."""
    h = x
    for i in (1, 2, 3):
        w = params[f"w{i}"].astype(jnp.bfloat16)
        h = jnp.dot(h.astype(jnp.bfloat16), w,
                    preferred_element_type=jnp.float32) + params[f"b{i}"]
        h = jnp.where(h >= 0, h, NEG_SLOPE * h)
    z = jnp.sum(h * params["w4"].reshape(1, -1), axis=-1, keepdims=True) + params["b4"]
    return jax.nn.sigmoid(z)


if __name__ == "__main__":
    key = jax.random.PRNGKey(0)
    k_param, k_x = jax.random.split(key)

    params = init_params(k_param)
    prepped = prepare_params(params)

    B = 8
    x = jax.random.normal(k_x, (B, 100), dtype=jnp.float32)

    out = jax.block_until_ready(discriminator_forward(x, prepped))
    ref = reference_forward(x, params)

    assert out.shape == (B, 1)
    assert jnp.allclose(out, ref, atol=2e-3, rtol=2e-3), "mismatch vs reference"
    print("KERNEL_OK")
</pallas_src>

<mosaic_0001>
module attributes {stable_mosaic.version = 11 : i64} {
  func.func @discriminator_kernel(%arg0: i32, %arg1: memref<128x128xbf16, #tpu.memory_space<vmem>>, %arg2: memref<128x256xbf16, #tpu.memory_space<vmem>>, %arg3: memref<1x256xf32, #tpu.memory_space<vmem>>, %arg4: memref<256x512xbf16, #tpu.memory_space<vmem>>, %arg5: memref<1x512xf32, #tpu.memory_space<vmem>>, %arg6: memref<512x256xbf16, #tpu.memory_space<vmem>>, %arg7: memref<1x256xf32, #tpu.memory_space<vmem>>, %arg8: memref<1x256xf32, #tpu.memory_space<vmem>>, %arg9: memref<1x1xf32, #tpu.memory_space<vmem>>, %arg10: memref<128x1xf32, #tpu.memory_space<vmem>>) attributes {dimension_semantics = [#tpu.dimension_semantics<parallel>], iteration_bounds = array<i64: 1>, scalar_prefetch = 0 : i64, scratch_operands = 0 : i64, tpu.core_type = #tpu.core_type<tc>, window_params = [{transform_indices = @transform_0, window_bounds = array<i64: 128, 128>}, {pipeline_mode = #tpu.pipeline_mode<synchronous>, transform_indices = @transform_1, window_bounds = array<i64: 128, 256>}, {pipeline_mode = #tpu.pipeline_mode<synchronous>, transform_indices = @transform_2, window_bounds = array<i64: 1, 256>}, {pipeline_mode = #tpu.pipeline_mode<synchronous>, transform_indices = @transform_3, window_bounds = array<i64: 256, 512>}, {pipeline_mode = #tpu.pipeline_mode<synchronous>, transform_indices = @transform_4, window_bounds = array<i64: 1, 512>}, {pipeline_mode = #tpu.pipeline_mode<synchronous>, transform_indices = @transform_5, window_bounds = array<i64: 512, 256>}, {pipeline_mode = #tpu.pipeline_mode<synchronous>, transform_indices = @transform_6, window_bounds = array<i64: 1, 256>}, {pipeline_mode = #tpu.pipeline_mode<synchronous>, transform_indices = @transform_7, window_bounds = array<i64: 1, 256>}, {pipeline_mode = #tpu.pipeline_mode<synchronous>, transform_indices = @transform_8, window_bounds = array<i64: 1, 1>}, {transform_indices = @transform_9, window_bounds = array<i64: 128, 1>}]} {
    %c0 = arith.constant 0 : index
    %c0_0 = arith.constant 0 : index
    %0 = vector.load %arg1[%c0, %c0_0] : memref<128x128xbf16, #tpu.memory_space<vmem>>, vector<128x128xbf16>
    %c0_1 = arith.constant 0 : index
    %c0_2 = arith.constant 0 : index
    %1 = vector.load %arg2[%c0_1, %c0_2] : memref<128x256xbf16, #tpu.memory_space<vmem>>, vector<128x256xbf16>
    %cst = arith.constant dense<0.000000e+00> : vector<128x256xf32>
    %2 = tpu.matmul %0, %1, %cst {dimension_numbers = #tpu.dot_dimension_numbers<[1], [0], [0], [1], [0, 0, 1, 1], [], []>} : vector<128x128xbf16>, vector<128x256xbf16>, vector<128x256xf32> -> vector<128x256xf32>
    %c0_3 = arith.constant 0 : index
    %c0_4 = arith.constant 0 : index
    %3 = vector.load %arg3[%c0_3, %c0_4] : memref<1x256xf32, #tpu.memory_space<vmem>>, vector<1x256xf32>
    %4 = vector.broadcast %3 : vector<1x256xf32> to vector<128x256xf32>
    %5 = arith.addf %2, %4 : vector<128x256xf32>
    %cst_5 = arith.constant 0.000000e+00 : f32
    %6 = vector.broadcast %cst_5 : f32 to vector<128x256xf32>
    %7 = arith.cmpf oge, %5, %6 : vector<128x256xf32>
    %cst_6 = arith.constant 2.000000e-01 : f32
    %8 = vector.broadcast %cst_6 : f32 to vector<128x256xf32>
    %9 = arith.mulf %8, %5 : vector<128x256xf32>
    %10 = arith.select %7, %5, %9 : vector<128x256xi1>, vector<128x256xf32>
    %11 = arith.truncf %10 : vector<128x256xf32> to vector<128x256xbf16>
    %c0_7 = arith.constant 0 : index
    %c0_8 = arith.constant 0 : index
    %12 = vector.load %arg4[%c0_7, %c0_8] : memref<256x512xbf16, #tpu.memory_space<vmem>>, vector<256x512xbf16>
    %cst_9 = arith.constant dense<0.000000e+00> : vector<128x512xf32>
    %13 = tpu.matmul %11, %12, %cst_9 {dimension_numbers = #tpu.dot_dimension_numbers<[1], [0], [0], [1], [0, 0, 1, 1], [], []>} : vector<128x256xbf16>, vector<256x512xbf16>, vector<128x512xf32> -> vector<128x512xf32>
    %c0_10 = arith.constant 0 : index
    %c0_11 = arith.constant 0 : index
    %14 = vector.load %arg5[%c0_10, %c0_11] : memref<1x512xf32, #tpu.memory_space<vmem>>, vector<1x512xf32>
    %15 = vector.broadcast %14 : vector<1x512xf32> to vector<128x512xf32>
    %16 = arith.addf %13, %15 : vector<128x512xf32>
    %cst_12 = arith.constant 0.000000e+00 : f32
    %17 = vector.broadcast %cst_12 : f32 to vector<128x512xf32>
    %18 = arith.cmpf oge, %16, %17 : vector<128x512xf32>
    %cst_13 = arith.constant 2.000000e-01 : f32
    %19 = vector.broadcast %cst_13 : f32 to vector<128x512xf32>
    %20 = arith.mulf %19, %16 : vector<128x512xf32>
    %21 = arith.select %18, %16, %20 : vector<128x512xi1>, vector<128x512xf32>
    %22 = arith.truncf %21 : vector<128x512xf32> to vector<128x512xbf16>
    %c0_14 = arith.constant 0 : index
    %c0_15 = arith.constant 0 : index
    %23 = vector.load %arg6[%c0_14, %c0_15] : memref<512x256xbf16, #tpu.memory_space<vmem>>, vector<512x256xbf16>
    %cst_16 = arith.constant dense<0.000000e+00> : vector<128x256xf32>
    %24 = tpu.matmul %22, %23, %cst_16 {dimension_numbers = #tpu.dot_dimension_numbers<[1], [0], [0], [1], [0, 0, 1, 1], [], []>} : vector<128x512xbf16>, vector<512x256xbf16>, vector<128x256xf32> -> vector<128x256xf32>
    %c0_17 = arith.constant 0 : index
    %c0_18 = arith.constant 0 : index
    %25 = vector.load %arg7[%c0_17, %c0_18] : memref<1x256xf32, #tpu.memory_space<vmem>>, vector<1x256xf32>
    %26 = vector.broadcast %25 : vector<1x256xf32> to vector<128x256xf32>
    %27 = arith.addf %24, %26 : vector<128x256xf32>
    %cst_19 = arith.constant 0.000000e+00 : f32
    %28 = vector.broadcast %cst_19 : f32 to vector<128x256xf32>
    %29 = arith.cmpf oge, %27, %28 : vector<128x256xf32>
    %cst_20 = arith.constant 2.000000e-01 : f32
    %30 = vector.broadcast %cst_20 : f32 to vector<128x256xf32>
    %31 = arith.mulf %30, %27 : vector<128x256xf32>
    %32 = arith.select %29, %27, %31 : vector<128x256xi1>, vector<128x256xf32>
    %c0_21 = arith.constant 0 : index
    %c0_22 = arith.constant 0 : index
    %33 = vector.load %arg8[%c0_21, %c0_22] : memref<1x256xf32, #tpu.memory_space<vmem>>, vector<1x256xf32>
    %34 = vector.broadcast %33 : vector<1x256xf32> to vector<128x256xf32>
    %35 = arith.mulf %32, %34 : vector<128x256xf32>
    %cst_23 = arith.constant dense<0.000000e+00> : vector<128xf32>
    %36 = vector.multi_reduction <add>, %35, %cst_23 [1] : vector<128x256xf32> to vector<128xf32>
    %37 = vector.shape_cast %36 : vector<128xf32> to vector<128x1xf32>
    %c0_24 = arith.constant 0 : index
    %c0_25 = arith.constant 0 : index
    %38 = vector.load %arg9[%c0_24, %c0_25] : memref<1x1xf32, #tpu.memory_space<vmem>>, vector<1x1xf32>
    %39 = vector.broadcast %38 : vector<1x1xf32> to vector<128x1xf32>
    %40 = arith.addf %37, %39 : vector<128x1xf32>
    %cst_26 = arith.constant 0.000000e+00 : f32
    %41 = vector.broadcast %cst_26 : f32 to vector<128x1xf32>
    %42 = arith.subf %41, %40 : vector<128x1xf32>
    %43 = math.exp %42 : vector<128x1xf32>
    %cst_27 = arith.constant 1.000000e+00 : f32
    %44 = vector.broadcast %cst_27 : f32 to vector<128x1xf32>
    %45 = arith.addf %44, %43 : vector<128x1xf32>
    %46 = tpu.reciprocal %45 {approx = true} : vector<128x1xf32> -> vector<128x1xf32>
    %c0_28 = arith.constant 0 : index
    %c0_29 = arith.constant 0 : index
    %47 = vector.load %arg10[%c0_28, %c0_29] : memref<128x1xf32, #tpu.memory_space<vmem>>, vector<128x1xf32>
    tpu.vector_store %arg10[%c0_28, %c0_29], %46 {strides = array<i32>} : memref<128x1xf32, #tpu.memory_space<vmem>>, vector<128x1xf32>,
    return
  }
  func.func @transform_0(%arg0: i32) -> (i32, i32) {
    %c0_i32 = arith.constant 0 : i32
    %c0_i32_0 = arith.constant 0 : i32
    return %arg0, %c0_i32 : i32, i32
  }
  func.func @transform_1(%arg0: i32) -> (i32, i32) {
    %c0_i32 = arith.constant 0 : i32
    %c0_i32_0 = arith.constant 0 : i32
    %c0_i32_1 = arith.constant 0 : i32
    return %c0_i32, %c0_i32_0 : i32, i32
  }
  func.func @transform_2(%arg0: i32) -> (i32, i32) {
    %c0_i32 = arith.constant 0 : i32
    %c0_i32_0 = arith.constant 0 : i32
    %c0_i32_1 = arith.constant 0 : i32
    return %c0_i32, %c0_i32_0 : i32, i32
  }
  func.func @transform_3(%arg0: i32) -> (i32, i32) {
    %c0_i32 = arith.constant 0 : i32
    %c0_i32_0 = arith.constant 0 : i32
    %c0_i32_1 = arith.constant 0 : i32
    return %c0_i32, %c0_i32_0 : i32, i32
  }
  func.func @transform_4(%arg0: i32) -> (i32, i32) {
    %c0_i32 = arith.constant 0 : i32
    %c0_i32_0 = arith.constant 0 : i32
    %c0_i32_1 = arith.constant 0 : i32
    return %c0_i32, %c0_i32_0 : i32, i32
  }
  func.func @transform_5(%arg0: i32) -> (i32, i32) {
    %c0_i32 = arith.constant 0 : i32
    %c0_i32_0 = arith.constant 0 : i32
    %c0_i32_1 = arith.constant 0 : i32
    return %c0_i32, %c0_i32_0 : i32, i32
  }
  func.func @transform_6(%arg0: i32) -> (i32, i32) {
    %c0_i32 = arith.constant 0 : i32
    %c0_i32_0 = arith.constant 0 : i32
    %c0_i32_1 = arith.constant 0 : i32
    return %c0_i32, %c0_i32_0 : i32, i32
  }
  func.func @transform_7(%arg0: i32) -> (i32, i32) {
    %c0_i32 = arith.constant 0 : i32
    %c0_i32_0 = arith.constant 0 : i32
    %c0_i32_1 = arith.constant 0 : i32
    return %c0_i32, %c0_i32_0 : i32, i32
  }
  func.func @transform_8(%arg0: i32) -> (i32, i32) {
    %c0_i32 = arith.constant 0 : i32
    %c0_i32_0 = arith.constant 0 : i32
    %c0_i32_1 = arith.constant 0 : i32
    return %c0_i32, %c0_i32_0 : i32, i32
  }
  func.func @transform_9(%arg0: i32) -> (i32, i32) {
    %c0_i32 = arith.constant 0 : i32
    %c0_i32_0 = arith.constant 0 : i32
    return %arg0, %c0_i32 : i32, i32
  }
}

</mosaic_0001>

<llo_original>
// kernel: tpu_custom_call.1
$region0: #{tpu_custom_call.1}
  #allocation0 [shape = 'u32[]', space=smem, size = 0x4, offset = 0x4, fixed_abs, tag = 'smem constant byte address 0x4 - core index']
  #allocation1 [shape = 'u32[144,128]{1,0:T(1,128)}', space=vmem, size = 0x12000, scoped, tag = 'internal scratch']
  #allocation2 [shape = 'f32[1,1]{1,0:T(1,128)S(1)}', space=vmem, size = 0x200, scoped, tag = 'scoped memory for tpu_custom_call.1']
  %s0 = inlined_call_operand.hbm [shape: bf16[128,128], index: 0, kind: input, shape index: {}]
  %s1 = inlined_call_operand.hbm [shape: bf16[128,256], index: 1, kind: input, shape index: {}]
  %s2 = inlined_call_operand.vmem [shape: f32[1,256], index: 2, kind: input, shape index: {}]
  %s3 = inlined_call_operand.hbm [shape: bf16[256,512], index: 3, kind: input, shape index: {}]
  %s4 = inlined_call_operand.vmem [shape: f32[1,512], index: 4, kind: input, shape index: {}]
  %s5 = inlined_call_operand.hbm [shape: bf16[512,256], index: 5, kind: input, shape index: {}]
  %s6 = inlined_call_operand.vmem [shape: f32[1,256], index: 6, kind: input, shape index: {}]
  %s7 = inlined_call_operand.vmem [shape: f32[1,256], index: 7, kind: input, shape index: {}]
  %s8 = inlined_call_operand.<no memory space> [shape: f32[1,1], index: 8, kind: input, shape index: {}]
  %s9 = inlined_call_operand.vmem [shape: f32[128,1], index: 9, kind: output, shape index: {}]
  %s10 = sld [smem:[#allocation0]]
  $region62: #{tpu_custom_call.1} parent=0
    _
  %s12 = ssub.s32 1, %s10
  %s13 = scalar_select 0, %s12, %s10
  %v14 = vstv %s8
  %15 = vst [vmem:[#allocation2] sm:$0x1] %v14
  $region1: #{tpu_custom_call.1} parent=0
    #allocation3 [shape = 'u8[32768]{0}', space=vmem, size = 0x8000, scoped, tag = 'input window, operand 0, single buffered']
    #allocation4 [shape = 's32[1]{0}', space=sflag, size = 0x4, scoped, tag = 'scoped memory for tpu_custom_call.1']
    #allocation5 [shape = 'u8[65536]{0}', space=vmem, size = 0x10000, scoped, tag = 'input window, operand 1, single buffered']
    #allocation6 [shape = 's32[1]{0}', space=sflag, size = 0x4, scoped, tag = 'scoped memory for tpu_custom_call.1']
    #allocation7 [shape = 'u8[262144]{0}', space=vmem, size = 0x40000, scoped, tag = 'input window, operand 3, single buffered']
    #allocation8 [shape = 'u8[262144]{0}', space=vmem, size = 0x40000, scoped, tag = 'input window, operand 5, single buffered']
    #allocation9 [shape = 's32[1]{0}', space=sflag, size = 0x4, scoped, tag = 'scoped memory for tpu_custom_call.1']
    %16 = vsyncpa [#allocation4], 0
    %17 = vsyncpa [#allocation6], 0
    %18 = vsyncpa [#allocation9], 0
    // Predicated region
    $region2: #{tpu_custom_call.1} parent=1 // pred_check
      _
    $region3: #{tpu_custom_call.1} parent=1 // pred_check_branch
      %20 = sbr.rel (0) target = $region5
    $region4: #{tpu_custom_call.1} parent=1 // pred_region
      %s22 = ssub.s32 1024, 1024
      %23 = vsyncadd [#allocation4], %s22
      %s24 = sshll.u32 [#allocation3], 4
      %s25 = int_to_ptr.vmem [resolvable:$true] %s24
      %30 = dma.hbm_to_vmem [thread:$0]  %s0, 1024, %s25, [#allocation4], 64, 64, 4
    $region5: #{tpu_custom_call.1} parent=1 // pred_fallthru
      _
    // Predicated region
    $region6: #{tpu_custom_call.1} parent=1 // pred_check
      _
    $region7: #{tpu_custom_call.1} parent=1 // pred_check_branch
      %32 = sbr.rel (0) target = $region9
    $region8: #{tpu_custom_call.1} parent=1 // pred_region
      %s34 = ssub.s32 2048, 2048
      %35 = vsyncadd [#allocation6], %s34
      %s36 = sshll.u32 [#allocation5], 4
      %s37 = int_to_ptr.vmem [resolvable:$true] %s36
      %42 = dma.hbm_to_vmem [thread:$0]  %s1, 2048, %s37, [#allocation6], 128, 128, 8
    $region9: #{tpu_custom_call.1} parent=1 // pred_fallthru
      _
    // Predicated region
    $region10: #{tpu_custom_call.1} parent=1 // pred_check
      _
    $region11: #{tpu_custom_call.1} parent=1 // pred_check_branch
      %44 = sbr.rel (0) target = $region13
    $region12: #{tpu_custom_call.1} parent=1 // pred_region
      _
    $region13: #{tpu_custom_call.1} parent=1 // pred_fallthru
      _
    // Predicated region
    $region14: #{tpu_custom_call.1} parent=1 // pred_check
      _
    $region15: #{tpu_custom_call.1} parent=1 // pred_check_branch
      %46 = sbr.rel (0) target = $region17
    $region16: #{tpu_custom_call.1} parent=1 // pred_region
      %s48 = ssub.s32 8192, 8192
      %49 = vsyncadd [#allocation6], %s48
      %s50 = sshll.u32 [#allocation7], 4
      %s51 = int_to_ptr.vmem [resolvable:$true] %s50
      %56 = dma.hbm_to_vmem [thread:$0]  %s3, 8192, %s51, [#allocation6], 256, 256, 16
    $region17: #{tpu_custom_call.1} parent=1 // pred_fallthru
      _
    // Predicated region
    $region18: #{tpu_custom_call.1} parent=1 // pred_check
      _
    $region19: #{tpu_custom_call.1} parent=1 // pred_check_branch
      %58 = sbr.rel (0) target = $region21
    $region20: #{tpu_custom_call.1} parent=1 // pred_region
      _
    $region21: #{tpu_custom_call.1} parent=1 // pred_fallthru
      _
    // Predicated region
    $region22: #{tpu_custom_call.1} parent=1 // pred_check
      _
    $region23: #{tpu_custom_call.1} parent=1 // pred_check_branch
      %60 = sbr.rel (0) target = $region25
    $region24: #{tpu_custom_call.1} parent=1 // pred_region
      %s62 = ssub.s32 8192, 8192
      %63 = vsyncadd [#allocation9], %s62
      %s64 = sshll.u32 [#allocation8], 4
      %s65 = int_to_ptr.vmem [resolvable:$true] %s64
      %70 = dma.hbm_to_vmem [thread:$0]  %s5, 8192, %s65, [#allocation9], 128, 128, 8
    $region25: #{tpu_custom_call.1} parent=1 // pred_fallthru
      _
    // Predicated region
    $region26: #{tpu_custom_call.1} parent=1 // pred_check
      _
    $region27: #{tpu_custom_call.1} parent=1 // pred_check_branch
      %72 = sbr.rel (0) target = $region29
    $region28: #{tpu_custom_call.1} parent=1 // pred_region
      _
    $region29: #{tpu_custom_call.1} parent=1 // pred_fallthru
      _
    // Predicated region
    $region30: #{tpu_custom_call.1} parent=1 // pred_check
      _
    $region31: #{tpu_custom_call.1} parent=1 // pred_check_branch
      %74 = sbr.rel (0) target = $region33
    $region32: #{tpu_custom_call.1} parent=1 // pred_region
      _
    $region33: #{tpu_custom_call.1} parent=1 // pred_fallthru
      _
    // Predicated region
    $region34: #{tpu_custom_call.1} parent=1 // pred_check
      _
    $region35: #{tpu_custom_call.1} parent=1 // pred_check_branch
      %76 = sbr.rel (0) target = $region37
    $region36: #{tpu_custom_call.1} parent=1 // pred_region
      _
    $region37: #{tpu_custom_call.1} parent=1 // pred_fallthru
      _
    // Predicated region
    $region38: #{tpu_custom_call.1} parent=1 // pred_check
      _
    $region39: #{tpu_custom_call.1} parent=1 // pred_check_branch
      %78 = sbr.rel (0) target = $region41
    $region40: #{tpu_custom_call.1} parent=1 // pred_region
      %79 = dma.done [#allocation4], 1024
    $region41: #{tpu_custom_call.1} parent=1 // pred_fallthru
      _
    // Predicated region
    $region42: #{tpu_custom_call.1} parent=1 // pred_check
      _
    $region43: #{tpu_custom_call.1} parent=1 // pred_check_branch
      %81 = sbr.rel (0) target = $region45
    $region44: #{tpu_custom_call.1} parent=1 // pred_region
      %82 = dma.done [#allocation6], 2048
    $region45: #{tpu_custom_call.1} parent=1 // pred_fallthru
      _
    // Predicated region
    $region46: #{tpu_custom_call.1} parent=1 // pred_check
      _
    $region47: #{tpu_custom_call.1} parent=1 // pred_check_branch
      %84 = sbr.rel (0) target = $region49
    $region48: #{tpu_custom_call.1} parent=1 // pred_region
      %85 = dma.done [#allocation6], 8192
    $region49: #{tpu_custom_call.1} parent=1 // pred_fallthru
      _
    // Predicated region
    $region50: #{tpu_custom_call.1} parent=1 // pred_check
      _
    $region51: #{tpu_custom_call.1} parent=1 // pred_check_branch
      %87 = sbr.rel (0) target = $region53
    $region52: #{tpu_custom_call.1} parent=1 // pred_region
      %88 = dma.done [#allocation9], 8192
    $region53: #{tpu_custom_call.1} parent=1 // pred_fallthru
      _
    %v90 = vld [vmem:[#allocation3] sm:$0xf]
    %v91 = vld [vmem:[#allocation3 + $0x4] sm:$0xf]
    %v92 = vld [vmem:[#allocation3 + $0x8] sm:$0xf]
    %v93 = vld [vmem:[#allocation3 + $0xc] sm:$0xf]
    %v94 = vld [vmem:[#allocation3 + $0x10] sm:$0xf]
    %v95 = vld [vmem:[#allocation3 + $0x14] sm:$0xf]
    %v96 = vld [vmem:[#allocation3 + $0x18] sm:$0xf]
    %v97 = vld [vmem:[#allocation3 + $0x1c] sm:$0xf]
    %v98 = vld [vmem:[#allocation3 + $0x20] sm:$0xf]
    %v99 = vld [vmem:[#allocation3 + $0x24] sm:$0xf]
    %v100 = vld [vmem:[#allocation3 + $0x28] sm:$0xf]
    %v101 = vld [vmem:[#allocation3 + $0x2c] sm:$0xf]
    %v102 = vld [vmem:[#allocation3 + $0x30] sm:$0xf]
    %v103 = vld [vmem:[#allocation3 + $0x34] sm:$0xf]
    %v104 = vld [vmem:[#allocation3 + $0x38] sm:$0xf]
    %v105 = vld [vmem:[#allocation3 + $0x3c] sm:$0xf]
    %v106 = vld [vmem:[#allocation5] sm:$0xff]
    %v107 = vld [vmem:[#allocation5 + $0x8] sm:$0xff]
    %v108 = vld [vmem:[#allocation5 + $0x10] sm:$0xff]
    %v109 = vld [vmem:[#allocation5 + $0x18] sm:$0xff]
    %v110 = vld [vmem:[#allocation5 + $0x20] sm:$0xff]
    %v111 = vld [vmem:[#allocation5 + $0x28] sm:$0xff]
    %v112 = vld [vmem:[#allocation5 + $0x30] sm:$0xff]
    %v113 = vld [vmem:[#allocation5 + $0x38] sm:$0xff]
    %v114 = vld [vmem:[#allocation5 + $0x40] sm:$0xff]
    %v115 = vld [vmem:[#allocation5 + $0x48] sm:$0xff]
    %v116 = vld [vmem:[#allocation5 + $0x50] sm:$0xff]
    %v117 = vld [vmem:[#allocation5 + $0x58] sm:$0xff]
    %v118 = vld [vmem:[#allocation5 + $0x60] sm:$0xff]
    %v119 = vld [vmem:[#allocation5 + $0x68] sm:$0xff]
    %v120 = vld [vmem:[#allocation5 + $0x70] sm:$0xff]
    %v121 = vld [vmem:[#allocation5 + $0x78] sm:$0xff]
    %v122 = vld [vmem:[%s2] sm:$0x3]
    %v124 = vlaneseq
    %v125 = vshrl.u32 %v124, 7
    %v126 = vsub.s32 0, %v125
    %v127 = vrot.slane %v122, %v126
    %v128 = vlaneseq
    %v129 = vshrl.u32 %v128, 7
    %v130 = vsub.s32 1, %v129
    %v131 = vrot.slane %v122, %v130
    %v150 = vunpack.c.l.b16 %v90
    %v151 = vunpack.c.l.b16 %v91
    %v152 = vunpack.c.l.b16 %v92
    %v153 = vunpack.c.l.b16 %v93
    %v154 = vunpack.c.l.b16 %v94
    %v155 = vunpack.c.l.b16 %v95
    %v156 = vunpack.c.l.b16 %v96
    %v157 = vunpack.c.l.b16 %v97
    %v158 = vunpack.c.l.b16 %v98
    %v159 = vunpack.c.l.b16 %v99
    %v160 = vunpack.c.l.b16 %v100
    %v161 = vunpack.c.l.b16 %v101
    %v162 = vunpack.c.l.b16 %v102
    %v163 = vunpack.c.l.b16 %v103
    %v164 = vunpack.c.l.b16 %v104
    %v165 = vunpack.c.l.b16 %v105
    %v166 = vpack.c.b16 %v151, %v150
    %v167 = vpack.c.b16 %v153, %v152
    %v168 = vpack.c.b16 %v155, %v154
    %v169 = vpack.c.b16 %v157, %v156
    %v170 = vpack.c.b16 %v159, %v158
    %v171 = vpack.c.b16 %v161, %v160
    %v172 = vpack.c.b16 %v163, %v162
    %v173 = vpack.c.b16 %v165, %v164
    %v198 = vunpack.c.l.b16 %v106
    %v199 = vunpack.c.h.b16 %v106
    %v200 = vunpack.c.l.b16 %v107
    %v201 = vunpack.c.h.b16 %v107
    %v202 = vunpack.c.l.b16 %v108
    %v203 = vunpack.c.h.b16 %v108
    %v204 = vunpack.c.l.b16 %v109
    %v205 = vunpack.c.h.b16 %v109
    %v206 = vunpack.c.l.b16 %v110
    %v207 = vunpack.c.h.b16 %v110
    %v208 = vunpack.c.l.b16 %v111
    %v209 = vunpack.c.h.b16 %v111
    %v210 = vunpack.c.l.b16 %v112
    %v211 = vunpack.c.h.b16 %v112
    %v212 = vunpack.c.l.b16 %v113
    %v213 = vunpack.c.h.b16 %v113
    %v214 = vunpack.c.l.b16 %v114
    %v215 = vunpack.c.h.b16 %v114
    %v216 = vunpack.c.l.b16 %v115
    %v217 = vunpack.c.h.b16 %v115
    %v218 = vunpack.c.l.b16 %v116
    %v219 = vunpack.c.h.b16 %v116
    %v220 = vunpack.c.l.b16 %v117
    %v221 = vunpack.c.h.b16 %v117
    %v222 = vunpack.c.l.b16 %v118
    %v223 = vunpack.c.h.b16 %v118
    %v224 = vunpack.c.l.b16 %v119
    %v225 = vunpack.c.h.b16 %v119
    %v226 = vunpack.c.l.b16 %v120
    %v227 = vunpack.c.h.b16 %v120
    %v228 = vunpack.c.l.b16 %v121
    %v229 = vunpack.c.h.b16 %v121
    %v230 = vpack.c.b16 %v200, %v198
    %v231 = vpack.c.b16 %v201, %v199
    %v232 = vpack.c.b16 %v204, %v202
    %v233 = vpack.c.b16 %v205, %v203
    %v234 = vpack.c.b16 %v208, %v206
    %v235 = vpack.c.b16 %v209, %v207
    %v236 = vpack.c.b16 %v212, %v210
    %v237 = vpack.c.b16 %v213, %v211
    %v238 = vpack.c.b16 %v216, %v214
    %v239 = vpack.c.b16 %v217, %v215
    %v240 = vpack.c.b16 %v220, %v218
    %v241 = vpack.c.b16 %v221, %v219
    %v242 = vpack.c.b16 %v224, %v222
    %v243 = vpack.c.b16 %v225, %v223
    %v244 = vpack.c.b16 %v228, %v226
    %v245 = vpack.c.b16 %v229, %v227
    %262 = vmatprep.subr.bf16.mxu0 %v231
    %263 = vmatpush1.bf16.msra.mxu0 %v230
    %264 = vmatprep.subr.bf16.mxu0 %v233
    %265 = vmatpush1.bf16.msra.mxu0 %v232
    %266 = vmatprep.subr.bf16.mxu0 %v235
    %267 = vmatpush1.bf16.msra.mxu0 %v234
    %268 = vmatprep.subr.bf16.mxu0 %v237
    %269 = vmatpush1.bf16.msra.mxu0 %v236
    %270 = vmatprep.subr.bf16.mxu0 %v239
    %271 = vmatpush1.bf16.msra.mxu0 %v238
    %272 = vmatprep.subr.bf16.mxu0 %v241
    %273 = vmatpush1.bf16.msra.mxu0 %v240
    %274 = vmatprep.subr.bf16.mxu0 %v243
    %275 = vmatpush1.bf16.msra.mxu0 %v242
    %276 = vmatprep.subr.bf16.mxu0 %v245
    %277 = vmatpush1.bf16.msra.mxu0 %v244
    %278 = vmatprep.subr.bf16.mxu0 0
    %279 = vmatpush1.bf16.msra.mxu0 0
    %280 = vmatprep.subr.bf16.mxu0 0
    %281 = vmatpush1.bf16.msra.mxu0 0
    %282 = vmatprep.subr.bf16.mxu0 0
    %283 = vmatpush1.bf16.msra.mxu0 0
    %284 = vmatprep.subr.bf16.mxu0 0
    %285 = vmatpush1.bf16.msra.mxu0 0
    %286 = vmatprep.subr.bf16.mxu0 0
    %287 = vmatpush1.bf16.msra.mxu0 0
    %288 = vmatprep.subr.bf16.mxu0 0
    %289 = vmatpush1.bf16.msra.mxu0 0
    %290 = vmatprep.subr.bf16.mxu0 0
    %291 = vmatpush1.bf16.msra.mxu0 0
    %292 = vmatprep.subr.bf16.mxu0 0
    %293 = vmatpush1.bf16.msra.mxu0 0
    %294 = vmatprep.mubr.bf16.mxu0 0
    %295 = vmatmul.mubr.bf16.gmra.mrb[0].mxu0 %v166
    %v296 = vpop.f32.mrb[0].mxu0
    %v297 = vadd.f32 %v127, %v296
    %v298 = vpop.f32.mrb[0].mxu0
    %v299 = vadd.f32 %v131, %v298
    %v300 = vpop.f32.mrb[0].mxu0
    %v301 = vadd.f32 %v127, %v300
    %v302 = vpop.f32.mrb[0].mxu0
    %v303 = vadd.f32 %v131, %v302
    %304 = vmatprep.mubr.bf16.mxu0 0
    %305 = vmatmul.mubr.bf16.gmra.mrb[0].mxu0 %v167
    %v306 = vpop.f32.mrb[0].mxu0
    %v307 = vadd.f32 %v127, %v306
    %v308 = vpop.f32.mrb[0].mxu0
    %v309 = vadd.f32 %v131, %v308
    %v310 = vpop.f32.mrb[0].mxu0
    %v311 = vadd.f32 %v127, %v310
    %v312 = vpop.f32.mrb[0].mxu0
    %v313 = vadd.f32 %v131, %v312
    %314 = vmatprep.mubr.bf16.mxu0 0
    %315 = vmatmul.mubr.bf16.gmra.mrb[0].mxu0 %v168
    %v316 = vpop.f32.mrb[0].mxu0
    %v317 = vadd.f32 %v127, %v316
    %v318 = vpop.f32.mrb[0].mxu0
    %v319 = vadd.f32 %v131, %v318
    %v320 = vpop.f32.mrb[0].mxu0
    %v321 = vadd.f32 %v127, %v320
    %v322 = vpop.f32.mrb[0].mxu0
    %v323 = vadd.f32 %v131, %v322
    %324 = vmatprep.mubr.bf16.mxu0 0
    %325 = vmatmul.mubr.bf16.gmra.mrb[0].mxu0 %v169
    %v326 = vpop.f32.mrb[0].mxu0
    %v327 = vadd.f32 %v127, %v326
    %v328 = vpop.f32.mrb[0].mxu0
    %v329 = vadd.f32 %v131, %v328
    %v330 = vpop.f32.mrb[0].mxu0
    %v331 = vadd.f32 %v127, %v330
    %v332 = vpop.f32.mrb[0].mxu0
    %v333 = vadd.f32 %v131, %v332
    %334 = vmatprep.mubr.bf16.mxu0 0
    %335 = vmatmul.mubr.bf16.gmra.mrb[0].mxu0 %v170
    %v336 = vpop.f32.mrb[0].mxu0
    %v337 = vadd.f32 %v127, %v336
    %v338 = vpop.f32.mrb[0].mxu0
    %v339 = vadd.f32 %v131, %v338
    %v340 = vpop.f32.mrb[0].mxu0
    %v341 = vadd.f32 %v127, %v340
    %v342 = vpop.f32.mrb[0].mxu0
    %v343 = vadd.f32 %v131, %v342
    %344 = vmatprep.mubr.bf16.mxu0 0
    %345 = vmatmul.mubr.bf16.gmra.mrb[0].mxu0 %v171
    %v346 = vpop.f32.mrb[0].mxu0
    %v347 = vadd.f32 %v127, %v346
    %v348 = vpop.f32.mrb[0].mxu0
    %v349 = vadd.f32 %v131, %v348
    %v350 = vpop.f32.mrb[0].mxu0
    %v351 = vadd.f32 %v127, %v350
    %v352 = vpop.f32.mrb[0].mxu0
    %v353 = vadd.f32 %v131, %v352
    %354 = vmatprep.mubr.bf16.mxu0 0
    %355 = vmatmul.mubr.bf16.gmra.mrb[0].mxu0 %v172
    %v356 = vpop.f32.mrb[0].mxu0
    %v357 = vadd.f32 %v127, %v356
    %v358 = vpop.f32.mrb[0].mxu0
    %v359 = vadd.f32 %v131, %v358
    %v360 = vpop.f32.mrb[0].mxu0
    %v361 = vadd.f32 %v127, %v360
    %v362 = vpop.f32.mrb[0].mxu0
    %v363 = vadd.f32 %v131, %v362
    %364 = vmatprep.mubr.bf16.mxu0 0
    %365 = vmatmul.mubr.bf16.gmra.mrb[0].mxu0 %v173
    %v366 = vpop.f32.mrb[0].mxu0
    %v367 = vadd.f32 %v127, %v366
    %v368 = vpop.f32.mrb[0].mxu0
    %v369 = vadd.f32 %v131, %v368
    %v370 = vpop.f32.mrb[0].mxu0
    %v371 = vadd.f32 %v127, %v370
    %v372 = vpop.f32.mrb[0].mxu0
    %v373 = vadd.f32 %v131, %v372
    %374 = vdwg.mxu0
    %vm375 = vcmp.ge.f32.partialorder %v297, 0.0
    %vm376 = vcmp.ge.f32.partialorder %v299, 0.0
    %vm377 = vcmp.ge.f32.partialorder %v301, 0.0
    %vm378 = vcmp.ge.f32.partialorder %v303, 0.0
    %vm379 = vcmp.ge.f32.partialorder %v307, 0.0
    %vm380 = vcmp.ge.f32.partialorder %v309, 0.0
    %vm381 = vcmp.ge.f32.partialorder %v311, 0.0
    %vm382 = vcmp.ge.f32.partialorder %v313, 0.0
    %vm383 = vcmp.ge.f32.partialorder %v317, 0.0
    %vm384 = vcmp.ge.f32.partialorder %v319, 0.0
    %vm385 = vcmp.ge.f32.partialorder %v321, 0.0
    %vm386 = vcmp.ge.f32.partialorder %v323, 0.0
    %vm387 = vcmp.ge.f32.partialorder %v327, 0.0
    %vm388 = vcmp.ge.f32.partialorder %v329, 0.0
    %vm389 = vcmp.ge.f32.partialorder %v331, 0.0
    %vm390 = vcmp.ge.f32.partialorder %v333, 0.0
    %vm391 = vcmp.ge.f32.partialorder %v337, 0.0
    %vm392 = vcmp.ge.f32.partialorder %v339, 0.0
    %vm393 = vcmp.ge.f32.partialorder %v341, 0.0
    %vm394 = vcmp.ge.f32.partialorder %v343, 0.0
    %vm395 = vcmp.ge.f32.partialorder %v347, 0.0
    %vm396 = vcmp.ge.f32.partialorder %v349, 0.0
    %vm397 = vcmp.ge.f32.partialorder %v351, 0.0
    %vm398 = vcmp.ge.f32.partialorder %v353, 0.0
    %vm399 = vcmp.ge.f32.partialorder %v357, 0.0
    %vm400 = vcmp.ge.f32.partialorder %v359, 0.0
    %vm401 = vcmp.ge.f32.partialorder %v361, 0.0
    %vm402 = vcmp.ge.f32.partialorder %v363, 0.0
    %vm403 = vcmp.ge.f32.partialorder %v367, 0.0
    %vm404 = vcmp.ge.f32.partialorder %v369, 0.0
    %vm405 = vcmp.ge.f32.partialorder %v371, 0.0
    %vm406 = vcmp.ge.f32.partialorder %v373, 0.0
    %v407 = vmul.f32 %v297, 0.2
    %v408 = vmul.f32 %v299, 0.2
    %v409 = vmul.f32 %v301, 0.2
    %v410 = vmul.f32 %v303, 0.2
    %v411 = vmul.f32 %v307, 0.2
    %v412 = vmul.f32 %v309, 0.2
    %v413 = vmul.f32 %v311, 0.2
    %v414 = vmul.f32 %v313, 0.2
    %v415 = vmul.f32 %v317, 0.2
    %v416 = vmul.f32 %v319, 0.2
    %v417 = vmul.f32 %v321, 0.2
    %v418 = vmul.f32 %v323, 0.2
    %v419 = vmul.f32 %v327, 0.2
    %v420 = vmul.f32 %v329, 0.2
    %v421 = vmul.f32 %v331, 0.2
    %v422 = vmul.f32 %v333, 0.2
    %v423 = vmul.f32 %v337, 0.2
    %v424 = vmul.f32 %v339, 0.2
    %v425 = vmul.f32 %v341, 0.2
    %v426 = vmul.f32 %v343, 0.2
    %v427 = vmul.f32 %v347, 0.2
    %v428 = vmul.f32 %v349, 0.2
    %v429 = vmul.f32 %v351, 0.2
    %v430 = vmul.f32 %v353, 0.2
    %v431 = vmul.f32 %v357, 0.2
    %v432 = vmul.f32 %v359, 0.2
    %v433 = vmul.f32 %v361, 0.2
    %v434 = vmul.f32 %v363, 0.2
    %v435 = vmul.f32 %v367, 0.2
    %v436 = vmul.f32 %v369, 0.2
    %v437 = vmul.f32 %v371, 0.2
    %v438 = vmul.f32 %v373, 0.2
    %v439 = vsel %vm375, %v297, %v407
    %v440 = vsel %vm376, %v299, %v408
    %v441 = vsel %vm377, %v301, %v409
    %v442 = vsel %vm378, %v303, %v410
    %v443 = vsel %vm379, %v307, %v411
    %v444 = vsel %vm380, %v309, %v412
    %v445 = vsel %vm381, %v311, %v413
    %v446 = vsel %vm382, %v313, %v414
    %v447 = vsel %vm383, %v317, %v415
    %v448 = vsel %vm384, %v319, %v416
    %v449 = vsel %vm385, %v321, %v417
    %v450 = vsel %vm386, %v323, %v418
    %v451 = vsel %vm387, %v327, %v419
    %v452 = vsel %vm388, %v329, %v420
    %v453 = vsel %vm389, %v331, %v421
    %v454 = vsel %vm390, %v333, %v422
    %v455 = vsel %vm391, %v337, %v423
    %v456 = vsel %vm392, %v339, %v424
    %v457 = vsel %vm393, %v341, %v425
    %v458 = vsel %vm394, %v343, %v426
    %v459 = vsel %vm395, %v347, %v427
    %v460 = vsel %vm396, %v349, %v428
    %v461 = vsel %vm397, %v351, %v429
    %v462 = vsel %vm398, %v353, %v430
    %v463 = vsel %vm399, %v357, %v431
    %v464 = vsel %vm400, %v359, %v432
    %v465 = vsel %vm401, %v361, %v433
    %v466 = vsel %vm402, %v363, %v434
    %v467 = vsel %vm403, %v367, %v435
    %v468 = vsel %vm404, %v369, %v436
    %v469 = vsel %vm405, %v371, %v437
    %v470 = vsel %vm406, %v373, %v438
    %v471 = vpack.c.bf16 %v441, %v439
    %v472 = vpack.c.bf16 %v442, %v440
    %v473 = vpack.c.bf16 %v445, %v443
    %v474 = vpack.c.bf16 %v446, %v444
    %v475 = vpack.c.bf16 %v449, %v447
    %v476 = vpack.c.bf16 %v450, %v448
    %v477 = vpack.c.bf16 %v453, %v451
    %v478 = vpack.c.bf16 %v454, %v452
    %v479 = vpack.c.bf16 %v457, %v455
    %v480 = vpack.c.bf16 %v458, %v456
    %v481 = vpack.c.bf16 %v461, %v459
    %v482 = vpack.c.bf16 %v462, %v460
    %v483 = vpack.c.bf16 %v465, %v463
    %v484 = vpack.c.bf16 %v466, %v464
    %v485 = vpack.c.bf16 %v469, %v467
    %v486 = vpack.c.bf16 %v470, %v468
    %v487 = vld [vmem:[#allocation7] sm:$0xff]
    %v488 = vld [vmem:[#allocation7 + $0x8] sm:$0xff]
    %v489 = vld [vmem:[#allocation7 + $0x10] sm:$0xff]
    %v490 = vld [vmem:[#allocation7 + $0x18] sm:$0xff]
    %v491 = vld [vmem:[#allocation7 + $0x20] sm:$0xff]
    %v492 = vld [vmem:[#allocation7 + $0x28] sm:$0xff]
    %v493 = vld [vmem:[#allocation7 + $0x30] sm:$0xff]
    %v494 = vld [vmem:[#allocation7 + $0x38] sm:$0xff]
    %v495 = vld [vmem:[#allocation7 + $0x40] sm:$0xff]
    %v496 = vld [vmem:[#allocation7 + $0x48] sm:$0xff]
    %v497 = vld [vmem:[#allocation7 + $0x50] sm:$0xff]
    %v498 = vld [vmem:[#allocation7 + $0x58] sm:$0xff]
    %v499 = vld [vmem:[#allocation7 + $0x60] sm:$0xff]
    %v500 = vld [vmem:[#allocation7 + $0x68] sm:$0xff]
    %v501 = vld [vmem:[#allocation7 + $0x70] sm:$0xff]
    %v502 = vld [vmem:[#allocation7 + $0x78] sm:$0xff]
    %v503 = vld [vmem:[#allocation7 + $0x80] sm:$0xff]
    %v504 = vld [vmem:[#allocation7 + $0x88] sm:$0xff]
    %v505 = vld [vmem:[#allocation7 + $0x90] sm:$0xff]
    %v506 = vld [vmem:[#allocation7 + $0x98] sm:$0xff]
    %v507 = vld [vmem:[#allocation7 + $0xa0] sm:$0xff]
    %v508 = vld [vmem:[#allocation7 + $0xa8] sm:$0xff]
    %v509 = vld [vmem:[#allocation7 + $0xb0] sm:$0xff]
    %v510 = vld [vmem:[#allocation7 + $0xb8] sm:$0xff]
    %v511 = vld [vmem:[#allocation7 + $0xc0] sm:$0xff]
    %v512 = vld [vmem:[#allocation7 + $0xc8] sm:$0xff]
    %v513 = vld [vmem:[#allocation7 + $0xd0] sm:$0xff]
    %v514 = vld [vmem:[#allocation7 + $0xd8] sm:$0xff]
    %v515 = vld [vmem:[#allocation7 + $0xe0] sm:$0xff]
    %v516 = vld [vmem:[#allocation7 + $0xe8] sm:$0xff]
    %v517 = vld [vmem:[#allocation7 + $0xf0] sm:$0xff]
    %v518 = vld [vmem:[#allocation7 + $0xf8] sm:$0xff]
    %v519 = vld [vmem:[#allocation7 + $0x100] sm:$0xff]
    %v520 = vld [vmem:[#allocation7 + $0x108] sm:$0xff]
    %v521 = vld [vmem:[#allocation7 + $0x110] sm:$0xff]
    %v522 = vld [vmem:[#allocation7 + $0x118] sm:$0xff]
    %v523 = vld [vmem:[#allocation7 + $0x120] sm:$0xff]
    %v524 = vld [vmem:[#allocation7 + $0x128] sm:$0xff]
    %v525 = vld [vmem:[#allocation7 + $0x130] sm:$0xff]
    %v526 = vld [vmem:[#allocation7 + $0x138] sm:$0xff]
    %v527 = vld [vmem:[#allocation7 + $0x140] sm:$0xff]
    %v528 = vld [vmem:[#allocation7 + $0x148] sm:$0xff]
    %v529 = vld [vmem:[#allocation7 + $0x150] sm:$0xff]
    %v530 = vld [vmem:[#allocation7 + $0x158] sm:$0xff]
    %v531 = vld [vmem:[#allocation7 + $0x160] sm:$0xff]
    %v532 = vld [vmem:[#allocation7 + $0x168] sm:$0xff]
    %v533 = vld [vmem:[#allocation7 + $0x170] sm:$0xff]
    %v534 = vld [vmem:[#allocation7 + $0x178] sm:$0xff]
    %v535 = vld [vmem:[#allocation7 + $0x180] sm:$0xff]
    %v536 = vld [vmem:[#allocation7 + $0x188] sm:$0xff]
    %v537 = vld [vmem:[#allocation7 + $0x190] sm:$0xff]
    %v538 = vld [vmem:[#allocation7 + $0x198] sm:$0xff]
    %v539 = vld [vmem:[#allocation7 + $0x1a0] sm:$0xff]
    %v540 = vld [vmem:[#allocation7 + $0x1a8] sm:$0xff]
    %v541 = vld [vmem:[#allocation7 + $0x1b0] sm:$0xff]
    %v542 = vld [vmem:[#allocation7 + $0x1b8] sm:$0xff]
    %v543 = vld [vmem:[#allocation7 + $0x1c0] sm:$0xff]
    %v544 = vld [vmem:[#allocation7 + $0x1c8] sm:$0xff]
    %v545 = vld [vmem:[#allocation7 + $0x1d0] sm:$0xff]
    %v546 = vld [vmem:[#allocation7 + $0x1d8] sm:$0xff]
    %v547 = vld [vmem:[#allocation7 + $0x1e0] sm:$0xff]
    %v548 = vld [vmem:[#allocation7 + $0x1e8] sm:$0xff]
    %v549 = vld [vmem:[#allocation7 + $0x1f0] sm:$0xff]
    %v550 = vld [vmem:[#allocation7 + $0x1f8] sm:$0xff]
    %v551 = vld [vmem:[%s4] sm:$0xf]
    %v553 = vlaneseq
    %v554 = vshrl.u32 %v553, 7
    %v555 = vsub.s32 0, %v554
    %v556 = vrot.slane %v551, %v555
    %v557 = vlaneseq
    %v558 = vshrl.u32 %v557, 7
    %v559 = vsub.s32 1, %v558
    %v560 = vrot.slane %v551, %v559
    %v561 = vlaneseq
    %v562 = vshrl.u32 %v561, 7
    %v563 = vsub.s32 2, %v562
    %v564 = vrot.slane %v551, %v563
    %v565 = vlaneseq
    %v566 = vshrl.u32 %v565, 7
    %v567 = vsub.s32 3, %v566
    %v568 = vrot.slane %v551, %v567
    %v637 = vunpack.c.l.b16 %v487
    %v638 = vunpack.c.h.b16 %v487
    %v639 = vunpack.c.l.b16 %v488
    %v640 = vunpack.c.h.b16 %v488
    %v641 = vunpack.c.l.b16 %v489
    %v642 = vunpack.c.h.b16 %v489
    %v643 = vunpack.c.l.b16 %v490
    %v644 = vunpack.c.h.b16 %v490
    %v645 = vunpack.c.l.b16 %v491
    %v646 = vunpack.c.h.b16 %v491
    %v647 = vunpack.c.l.b16 %v492
    %v648 = vunpack.c.h.b16 %v492
    %v649 = vunpack.c.l.b16 %v493
    %v650 = vunpack.c.h.b16 %v493
    %v651 = vunpack.c.l.b16 %v494
    %v652 = vunpack.c.h.b16 %v494
    %v653 = vunpack.c.l.b16 %v495
    %v654 = vunpack.c.h.b16 %v495
    %v655 = vunpack.c.l.b16 %v496
    %v656 = vunpack.c.h.b16 %v496
    %v657 = vunpack.c.l.b16 %v497
    %v658 = vunpack.c.h.b16 %v497
    %v659 = vunpack.c.l.b16 %v498
    %v660 = vunpack.c.h.b16 %v498
    %v661 = vunpack.c.l.b16 %v499
    %v662 = vunpack.c.h.b16 %v499
    %v663 = vunpack.c.l.b16 %v500
    %v664 = vunpack.c.h.b16 %v500
    %v665 = vunpack.c.l.b16 %v501
    %v666 = vunpack.c.h.b16 %v501
    %v667 = vunpack.c.l.b16 %v502
    %v668 = vunpack.c.h.b16 %v502
    %v669 = vunpack.c.l.b16 %v503
    %v670 = vunpack.c.h.b16 %v503
    %v671 = vunpack.c.l.b16 %v504
    %v672 = vunpack.c.h.b16 %v504
    %v673 = vunpack.c.l.b16 %v505
    %v674 = vunpack.c.h.b16 %v505
    %v675 = vunpack.c.l.b16 %v506
    %v676 = vunpack.c.h.b16 %v506
    %v677 = vunpack.c.l.b16 %v507
    %v678 = vunpack.c.h.b16 %v507
    %v679 = vunpack.c.l.b16 %v508
    %v680 = vunpack.c.h.b16 %v508
    %v681 = vunpack.c.l.b16 %v509
    %v682 = vunpack.c.h.b16 %v509
    %v683 = vunpack.c.l.b16 %v510
    %v684 = vunpack.c.h.b16 %v510
    %v685 = vunpack.c.l.b16 %v511
    %v686 = vunpack.c.h.b16 %v511
    %v687 = vunpack.c.l.b16 %v512
    %v688 = vunpack.c.h.b16 %v512
    %v689 = vunpack.c.l.b16 %v513
    %v690 = vunpack.c.h.b16 %v513
    %v691 = vunpack.c.l.b16 %v514
    %v692 = vunpack.c.h.b16 %v514
    %v693 = vunpack.c.l.b16 %v515
    %v694 = vunpack.c.h.b16 %v515
    %v695 = vunpack.c.l.b16 %v516
    %v696 = vunpack.c.h.b16 %v516
    %v697 = vunpack.c.l.b16 %v517
    %v698 = vunpack.c.h.b16 %v517
    %v699 = vunpack.c.l.b16 %v518
    %v700 = vunpack.c.h.b16 %v518
    %v701 = vunpack.c.l.b16 %v519
    %v702 = vunpack.c.h.b16 %v519
    %v703 = vunpack.c.l.b16 %v520
    %v704 = vunpack.c.h.b16 %v520
    %v705 = vunpack.c.l.b16 %v521
    %v706 = vunpack.c.h.b16 %v521
    %v707 = vunpack.c.l.b16 %v522
    %v708 = vunpack.c.h.b16 %v522
    %v709 = vunpack.c.l.b16 %v523
    %v710 = vunpack.c.h.b16 %v523
    %v711 = vunpack.c.l.b16 %v524
    %v712 = vunpack.c.h.b16 %v524
    %v713 = vunpack.c.l.b16 %v525
    %v714 = vunpack.c.h.b16 %v525
    %v715 = vunpack.c.l.b16 %v526
    %v716 = vunpack.c.h.b16 %v526
    %v717 = vunpack.c.l.b16 %v527
    %v718 = vunpack.c.h.b16 %v527
    %v719 = vunpack.c.l.b16 %v528
    %v720 = vunpack.c.h.b16 %v528
    %v721 = vunpack.c.l.b16 %v529
    %v722 = vunpack.c.h.b16 %v529
    %v723 = vunpack.c.l.b16 %v530
    %v724 = vunpack.c.h.b16 %v530
    %v725 = vunpack.c.l.b16 %v531
    %v726 = vunpack.c.h.b16 %v531
    %v727 = vunpack.c.l.b16 %v532
    %v728 = vunpack.c.h.b16 %v532
    %v729 = vunpack.c.l.b16 %v533
    %v730 = vunpack.c.h.b16 %v533
    %v731 = vunpack.c.l.b16 %v534
    %v732 = vunpack.c.h.b16 %v534
    %v733 = vunpack.c.l.b16 %v535
    %v734 = vunpack.c.h.b16 %v535
    %v735 = vunpack.c.l.b16 %v536
    %v736 = vunpack.c.h.b16 %v536
    %v737 = vunpack.c.l.b16 %v537
    %v738 = vunpack.c.h.b16 %v537
    %v739 = vunpack.c.l.b16 %v538
    %v740 = vunpack.c.h.b16 %v538
    %v741 = vunpack.c.l.b16 %v539
    %v742 = vunpack.c.h.b16 %v539
    %v743 = vunpack.c.l.b16 %v540
    %v744 = vunpack.c.h.b16 %v540
    %v745 = vunpack.c.l.b16 %v541
    %v746 = vunpack.c.h.b16 %v541
    %v747 = vunpack.c.l.b16 %v542
    %v748 = vunpack.c.h.b16 %v542
    %v749 = vunpack.c.l.b16 %v543
    %v750 = vunpack.c.h.b16 %v543
    %v751 = vunpack.c.l.b16 %v544
    %v752 = vunpack.c.h.b16 %v544
    %v753 = vunpack.c.l.b16 %v545
    %v754 = vunpack.c.h.b16 %v545
    %v755 = vunpack.c.l.b16 %v546
    %v756 = vunpack.c.h.b16 %v546
    %v757 = vunpack.c.l.b16 %v547
    %v758 = vunpack.c.h.b16 %v547
    %v759 = vunpack.c.l.b16 %v548
    %v760 = vunpack.c.h.b16 %v548
    %v761 = vunpack.c.l.b16 %v549
    %v762 = vunpack.c.h.b16 %v549
    %v763 = vunpack.c.l.b16 %v550
    %v764 = vunpack.c.h.b16 %v550
    %v765 = vpack.c.b16 %v641, %v637
    %v766 = vpack.c.b16 %v642, %v638
    %v767 = vpack.c.b16 %v643, %v639
    %v768 = vpack.c.b16 %v644, %v640
    %v769 = vpack.c.b16 %v649, %v645
    %v770 = vpack.c.b16 %v650, %v646
    %v771 = vpack.c.b16 %v651, %v647
    %v772 = vpack.c.b16 %v652, %v648
    %v773 = vpack.c.b16 %v657, %v653
    %v774 = vpack.c.b16 %v658, %v654
    %v775 = vpack.c.b16 %v659, %v655
    %v776 = vpack.c.b16 %v660, %v656
    %v777 = vpack.c.b16 %v665, %v661
    %v778 = vpack.c.b16 %v666, %v662
    %v779 = vpack.c.b16 %v667, %v663
    %v780 = vpack.c.b16 %v668, %v664
    %v781 = vpack.c.b16 %v673, %v669
    %v782 = vpack.c.b16 %v674, %v670
    %v783 = vpack.c.b16 %v675, %v671
    %v784 = vpack.c.b16 %v676, %v672
    %v785 = vpack.c.b16 %v681, %v677
    %v786 = vpack.c.b16 %v682, %v678
    %v787 = vpack.c.b16 %v683, %v679
    %v788 = vpack.c.b16 %v684, %v680
    %v789 = vpack.c.b16 %v689, %v685
    %v790 = vpack.c.b16 %v690, %v686
    %v791 = vpack.c.b16 %v691, %v687
    %v792 = vpack.c.b16 %v692, %v688
    %v793 = vpack.c.b16 %v697, %v693
    %v794 = vpack.c.b16 %v698, %v694
    %v795 = vpack.c.b16 %v699, %v695
    %v796 = vpack.c.b16 %v700, %v696
    %v797 = vpack.c.b16 %v705, %v701
    %v798 = vpack.c.b16 %v706, %v702
    %v799 = vpack.c.b16 %v707, %v703
    %v800 = vpack.c.b16 %v708, %v704
    %v801 = vpack.c.b16 %v713, %v709
    %v802 = vpack.c.b16 %v714, %v710
    %v803 = vpack.c.b16 %v715, %v711
    %v804 = vpack.c.b16 %v716, %v712
    %v805 = vpack.c.b16 %v721, %v717
    %v806 = vpack.c.b16 %v722, %v718
    %v807 = vpack.c.b16 %v723, %v719
    %v808 = vpack.c.b16 %v724, %v720
    %v809 = vpack.c.b16 %v729, %v725
    %v810 = vpack.c.b16 %v730, %v726
    %v811 = vpack.c.b16 %v731, %v727
    %v812 = vpack.c.b16 %v732, %v728
    %v813 = vpack.c.b16 %v737, %v733
    %v814 = vpack.c.b16 %v738, %v734
    %v815 = vpack.c.b16 %v739, %v735
    %v816 = vpack.c.b16 %v740, %v736
    %v817 = vpack.c.b16 %v745, %v741
    %v818 = vpack.c.b16 %v746, %v742
    %v819 = vpack.c.b16 %v747, %v743
    %v820 = vpack.c.b16 %v748, %v744
    %v821 = vpack.c.b16 %v753, %v749
    %v822 = vpack.c.b16 %v754, %v750
    %v823 = vpack.c.b16 %v755, %v751
    %v824 = vpack.c.b16 %v756, %v752
    %v825 = vpack.c.b16 %v761, %v757
    %v826 = vpack.c.b16 %v762, %v758
    %v827 = vpack.c.b16 %v763, %v759
    %v828 = vpack.c.b16 %v764, %v760
    %893 = vmatprep.subr.bf16.mxu0 %v766
    %894 = vmatpush1.bf16.msra.mxu0 %v765
    %895 = vmatprep.subr.bf16.mxu0 %v770
    %896 = vmatpush1.bf16.msra.mxu0 %v769
    %897 = vmatprep.subr.bf16.mxu0 %v774
    %898 = vmatpush1.bf16.msra.mxu0 %v773
    %899 = vmatprep.subr.bf16.mxu0 %v778
    %900 = vmatpush1.bf16.msra.mxu0 %v777
    %901 = vmatprep.subr.bf16.mxu0 %v782
    %902 = vmatpush1.bf16.msra.mxu0 %v781
    %903 = vmatprep.subr.bf16.mxu0 %v786
    %904 = vmatpush1.bf16.msra.mxu0 %v785
    %905 = vmatprep.subr.bf16.mxu0 %v790
    %906 = vmatpush1.bf16.msra.mxu0 %v789
    %907 = vmatprep.subr.bf16.mxu0 %v794
    %908 = vmatpush1.bf16.msra.mxu0 %v793
    %909 = vmatprep.subr.bf16.mxu0 %v798
    %910 = vmatpush1.bf16.msra.mxu0 %v797
    %911 = vmatprep.subr.bf16.mxu0 %v802
    %912 = vmatpush1.bf16.msra.mxu0 %v801
    %913 = vmatprep.subr.bf16.mxu0 %v806
    %914 = vmatpush1.bf16.msra.mxu0 %v805
    %915 = vmatprep.subr.bf16.mxu0 %v810
    %916 = vmatpush1.bf16.msra.mxu0 %v809
    %917 = vmatprep.subr.bf16.mxu0 %v814
    %918 = vmatpush1.bf16.msra.mxu0 %v813
    %919 = vmatprep.subr.bf16.mxu0 %v818
    %920 = vmatpush1.bf16.msra.mxu0 %v817
    %921 = vmatprep.subr.bf16.mxu0 %v822
    %922 = vmatpush1.bf16.msra.mxu0 %v821
    %923 = vmatprep.subr.bf16.mxu0 %v826
    %924 = vmatpush1.bf16.msra.mxu0 %v825
    %925 = vmatprep.mubr.bf16.mxu0 %v472
    %926 = vmatmul.mubr.bf16.gmra.mrb[0].mxu0 %v471
    %v927 = vpop.f32.mrb[0].mxu0
    %v928 = vadd.f32 %v556, %v927
    %v929 = vpop.f32.mrb[0].mxu0
    %v930 = vadd.f32 %v560, %v929
    %v931 = vpop.f32.mrb[0].mxu0
    %v932 = vadd.f32 %v556, %v931
    %v933 = vpop.f32.mrb[0].mxu0
    %v934 = vadd.f32 %v560, %v933
    %935 = vmatprep.mubr.bf16.mxu0 %v474
    %936 = vmatmul.mubr.bf16.gmra.mrb[0].mxu0 %v473
    %v937 = vpop.f32.mrb[0].mxu0
    %v938 = vadd.f32 %v556, %v937
    %v939 = vpop.f32.mrb[0].mxu0
    %v940 = vadd.f32 %v560, %v939
    %v941 = vpop.f32.mrb[0].mxu0
    %v942 = vadd.f32 %v556, %v941
    %v943 = vpop.f32.mrb[0].mxu0
    %v944 = vadd.f32 %v560, %v943
    %945 = vmatprep.mubr.bf16.mxu0 %v476
    %946 = vmatmul.mubr.bf16.gmra.mrb[0].mxu0 %v475
    %v947 = vpop.f32.mrb[0].mxu0
    %v948 = vadd.f32 %v556, %v947
    %v949 = vpop.f32.mrb[0].mxu0
    %v950 = vadd.f32 %v560, %v949
    %v951 = vpop.f32.mrb[0].mxu0
    %v952 = vadd.f32 %v556, %v951
    %v953 = vpop.f32.mrb[0].mxu0
    %v954 = vadd.f32 %v560, %v953
    %955 = vmatprep.mubr.bf16.mxu0 %v478
    %956 = vmatmul.mubr.bf16.gmra.mrb[0].mxu0 %v477
    %v957 = vpop.f32.mrb[0].mxu0
    %v958 = vadd.f32 %v556, %v957
    %v959 = vpop.f32.mrb[0].mxu0
    %v960 = vadd.f32 %v560, %v959
    %v961 = vpop.f32.mrb[0].mxu0
    %v962 = vadd.f32 %v556, %v961
    %v963 = vpop.f32.mrb[0].mxu0
    %v964 = vadd.f32 %v560, %v963
    %965 = vmatprep.mubr.bf16.mxu0 %v480
    %966 = vmatmul.mubr.bf16.gmra.mrb[0].mxu0 %v479
    %v967 = vpop.f32.mrb[0].mxu0
    %v968 = vadd.f32 %v556, %v967
    %v969 = vpop.f32.mrb[0].mxu0
    %v970 = vadd.f32 %v560, %v969
    %v971 = vpop.f32.mrb[0].mxu0
    %v972 = vadd.f32 %v556, %v971
    %v973 = vpop.f32.mrb[0].mxu0
    %v974 = vadd.f32 %v560, %v973
    %975 = vmatprep.mubr.bf16.mxu0 %v482
    %976 = vmatmul.mubr.bf16.gmra.mrb[0].mxu0 %v481
    %v977 = vpop.f32.mrb[0].mxu0
    %v978 = vadd.f32 %v556, %v977
    %v979 = vpop.f32.mrb[0].mxu0
    %v980 = vadd.f32 %v560, %v979
    %v981 = vpop.f32.mrb[0].mxu0
    %v982 = vadd.f32 %v556, %v981
    %v983 = vpop.f32.mrb[0].mxu0
    %v984 = vadd.f32 %v560, %v983
    %985 = vmatprep.mubr.bf16.mxu0 %v484
    %986 = vmatmul.mubr.bf16.gmra.mrb[0].mxu0 %v483
    %v987 = vpop.f32.mrb[0].mxu0
    %v988 = vadd.f32 %v556, %v987
    %v989 = vpop.f32.mrb[0].mxu0
    %v990 = vadd.f32 %v560, %v989
    %v991 = vpop.f32.mrb[0].mxu0
    %v992 = vadd.f32 %v556, %v991
    %v993 = vpop.f32.mrb[0].mxu0
    %v994 = vadd.f32 %v560, %v993
    %995 = vmatprep.mubr.bf16.mxu0 %v486
    %996 = vmatmul.mubr.bf16.gmra.mrb[0].mxu0 %v485
    %v997 = vpop.f32.mrb[0].mxu0
    %v998 = vadd.f32 %v556, %v997
    %v999 = vpop.f32.mrb[0].mxu0
    %v1000 = vadd.f32 %v560, %v999
    %v1001 = vpop.f32.mrb[0].mxu0
    %v1002 = vadd.f32 %v556, %v1001
    %v1003 = vpop.f32.mrb[0].mxu0
    %v1004 = vadd.f32 %v560, %v1003
    %1005 = vdwg.mxu0
    %1006 = vmatprep.subr.bf16.mxu0 %v768
    %1007 = vmatpush1.bf16.msra.mxu0 %v767
    %1008 = vmatprep.subr.bf16.mxu0 %v772
    %1009 = vmatpush1.bf16.msra.mxu0 %v771
    %1010 = vmatprep.subr.bf16.mxu0 %v776
    %1011 = vmatpush1.bf16.msra.mxu0 %v775
    %1012 = vmatprep.subr.bf16.mxu0 %v780
    %1013 = vmatpush1.bf16.msra.mxu0 %v779
    %1014 = vmatprep.subr.bf16.mxu0 %v784
    %1015 = vmatpush1.bf16.msra.mxu0 %v783
    %1016 = vmatprep.subr.bf16.mxu0 %v788
    %1017 = vmatpush1.bf16.msra.mxu0 %v787
    %1018 = vmatprep.subr.bf16.mxu0 %v792
    %1019 = vmatpush1.bf16.msra.mxu0 %v791
    %1020 = vmatprep.subr.bf16.mxu0 %v796
    %1021 = vmatpush1.bf16.msra.mxu0 %v795
    %1022 = vmatprep.subr.bf16.mxu0 %v800
    %1023 = vmatpush1.bf16.msra.mxu0 %v799
    %1024 = vmatprep.subr.bf16.mxu0 %v804
    %1025 = vmatpush1.bf16.msra.mxu0 %v803
    %1026 = vmatprep.subr.bf16.mxu0 %v808
    %1027 = vmatpush1.bf16.msra.mxu0 %v807
    %1028 = vmatprep.subr.bf16.mxu0 %v812
    %1029 = vmatpush1.bf16.msra.mxu0 %v811
    %1030 = vmatprep.subr.bf16.mxu0 %v816
    %1031 = vmatpush1.bf16.msra.mxu0 %v815
    %1032 = vmatprep.subr.bf16.mxu0 %v820
    %1033 = vmatpush1.bf16.msra.mxu0 %v819
    %1034 = vmatprep.subr.bf16.mxu0 %v824
    %1035 = vmatpush1.bf16.msra.mxu0 %v823
    %1036 = vmatprep.subr.bf16.mxu0 %v828
    %1037 = vmatpush1.bf16.msra.mxu0 %v827
    %1038 = vmatprep.mubr.bf16.mxu0 %v472
    %1039 = vmatmul.mubr.bf16.gmra.mrb[0].mxu0 %v471
    %v1040 = vpop.f32.mrb[0].mxu0
    %v1041 = vadd.f32 %v564, %v1040
    %v1042 = vpop.f32.mrb[0].mxu0
    %v1043 = vadd.f32 %v568, %v1042
    %v1044 = vpop.f32.mrb[0].mxu0
    %v1045 = vadd.f32 %v564, %v1044
    %v1046 = vpop.f32.mrb[0].mxu0
    %v1047 = vadd.f32 %v568, %v1046
    %1048 = vmatprep.mubr.bf16.mxu0 %v474
    %1049 = vmatmul.mubr.bf16.gmra.mrb[0].mxu0 %v473
    %v1050 = vpop.f32.mrb[0].mxu0
    %v1051 = vadd.f32 %v564, %v1050
    %v1052 = vpop.f32.mrb[0].mxu0
    %v1053 = vadd.f32 %v568, %v1052
    %v1054 = vpop.f32.mrb[0].mxu0
    %v1055 = vadd.f32 %v564, %v1054
    %v1056 = vpop.f32.mrb[0].mxu0
    %v1057 = vadd.f32 %v568, %v1056
    %1058 = vmatprep.mubr.bf16.mxu0 %v476
    %1059 = vmatmul.mubr.bf16.gmra.mrb[0].mxu0 %v475
    %v1060 = vpop.f32.mrb[0].mxu0
    %v1061 = vadd.f32 %v564, %v1060
    %v1062 = vpop.f32.mrb[0].mxu0
    %v1063 = vadd.f32 %v568, %v1062
    %v1064 = vpop.f32.mrb[0].mxu0
    %v1065 = vadd.f32 %v564, %v1064
    %v1066 = vpop.f32.mrb[0].mxu0
    %v1067 = vadd.f32 %v568, %v1066
    %1068 = vmatprep.mubr.bf16.mxu0 %v478
    %1069 = vmatmul.mubr.bf16.gmra.mrb[0].mxu0 %v477
    %v1070 = vpop.f32.mrb[0].mxu0
    %v1071 = vadd.f32 %v564, %v1070
    %v1072 = vpop.f32.mrb[0].mxu0
    %v1073 = vadd.f32 %v568, %v1072
    %v1074 = vpop.f32.mrb[0].mxu0
    %v1075 = vadd.f32 %v564, %v1074
    %v1076 = vpop.f32.mrb[0].mxu0
    %v1077 = vadd.f32 %v568, %v1076
    %1078 = vmatprep.mubr.bf16.mxu0 %v480
    %1079 = vmatmul.mubr.bf16.gmra.mrb[0].mxu0 %v479
    %v1080 = vpop.f32.mrb[0].mxu0
    %v1081 = vadd.f32 %v564, %v1080
    %v1082 = vpop.f32.mrb[0].mxu0
    %v1083 = vadd.f32 %v568, %v1082
    %v1084 = vpop.f32.mrb[0].mxu0
    %v1085 = vadd.f32 %v564, %v1084
    %v1086 = vpop.f32.mrb[0].mxu0
    %v1087 = vadd.f32 %v568, %v1086
    %1088 = vmatprep.mubr.bf16.mxu0 %v482
    %1089 = vmatmul.mubr.bf16.gmra.mrb[0].mxu0 %v481
    %v1090 = vpop.f32.mrb[0].mxu0
    %v1091 = vadd.f32 %v564, %v1090
    %v1092 = vpop.f32.mrb[0].mxu0
    %v1093 = vadd.f32 %v568, %v1092
    %v1094 = vpop.f32.mrb[0].mxu0
    %v1095 = vadd.f32 %v564, %v1094
    %v1096 = vpop.f32.mrb[0].mxu0
    %v1097 = vadd.f32 %v568, %v1096
    %1098 = vmatprep.mubr.bf16.mxu0 %v484
    %1099 = vmatmul.mubr.bf16.gmra.mrb[0].mxu0 %v483
    %v1100 = vpop.f32.mrb[0].mxu0
    %v1101 = vadd.f32 %v564, %v1100
    %v1102 = vpop.f32.mrb[0].mxu0
    %v1103 = vadd.f32 %v568, %v1102
    %v1104 = vpop.f32.mrb[0].mxu0
    %v1105 = vadd.f32 %v564, %v1104
    %v1106 = vpop.f32.mrb[0].mxu0
    %v1107 = vadd.f32 %v568, %v1106
    %1108 = vmatprep.mubr.bf16.mxu0 %v486
    %1109 = vmatmul.mubr.bf16.gmra.mrb[0].mxu0 %v485
    %v1110 = vpop.f32.mrb[0].mxu0
    %v1111 = vadd.f32 %v564, %v1110
    %v1112 = vpop.f32.mrb[0].mxu0
    %v1113 = vadd.f32 %v568, %v1112
    %v1114 = vpop.f32.mrb[0].mxu0
    %v1115 = vadd.f32 %v564, %v1114
    %v1116 = vpop.f32.mrb[0].mxu0
    %v1117 = vadd.f32 %v568, %v1116
    %1118 = vdwg.mxu0
    %vm1119 = vcmp.ge.f32.partialorder %v928, 0.0
    %vm1120 = vcmp.ge.f32.partialorder %v930, 0.0
    %vm1121 = vcmp.ge.f32.partialorder %v1041, 0.0
    %vm1122 = vcmp.ge.f32.partialorder %v1043, 0.0
    %vm1123 = vcmp.ge.f32.partialorder %v932, 0.0
    %vm1124 = vcmp.ge.f32.partialorder %v934, 0.0
    %vm1125 = vcmp.ge.f32.partialorder %v1045, 0.0
    %vm1126 = vcmp.ge.f32.partialorder %v1047, 0.0
    %vm1127 = vcmp.ge.f32.partialorder %v938, 0.0
    %vm1128 = vcmp.ge.f32.partialorder %v940, 0.0
    %vm1129 = vcmp.ge.f32.partialorder %v1051, 0.0
    %vm1130 = vcmp.ge.f32.partialorder %v1053, 0.0
    %vm1131 = vcmp.ge.f32.partialorder %v942, 0.0
    %vm1132 = vcmp.ge.f32.partialorder %v944, 0.0
    %vm1133 = vcmp.ge.f32.partialorder %v1055, 0.0
    %vm1134 = vcmp.ge.f32.partialorder %v1057, 0.0
    %vm1135 = vcmp.ge.f32.partialorder %v948, 0.0
    %vm1136 = vcmp.ge.f32.partialorder %v950, 0.0
    %vm1137 = vcmp.ge.f32.partialorder %v1061, 0.0
    %vm1138 = vcmp.ge.f32.partialorder %v1063, 0.0
    %vm1139 = vcmp.ge.f32.partialorder %v952, 0.0
    %vm1140 = vcmp.ge.f32.partialorder %v954, 0.0
    %vm1141 = vcmp.ge.f32.partialorder %v1065, 0.0
    %vm1142 = vcmp.ge.f32.partialorder %v1067, 0.0
    %vm1143 = vcmp.ge.f32.partialorder %v958, 0.0
    %vm1144 = vcmp.ge.f32.partialorder %v960, 0.0
    %vm1145 = vcmp.ge.f32.partialorder %v1071, 0.0
    %vm1146 = vcmp.ge.f32.partialorder %v1073, 0.0
    %vm1147 = vcmp.ge.f32.partialorder %v962, 0.0
    %vm1148 = vcmp.ge.f32.partialorder %v964, 0.0
    %vm1149 = vcmp.ge.f32.partialorder %v1075, 0.0
    %vm1150 = vcmp.ge.f32.partialorder %v1077, 0.0
    %vm1151 = vcmp.ge.f32.partialorder %v968, 0.0
    %vm1152 = vcmp.ge.f32.partialorder %v970, 0.0
    %vm1153 = vcmp.ge.f32.partialorder %v1081, 0.0
    %vm1154 = vcmp.ge.f32.partialorder %v1083, 0.0
    %vm1155 = vcmp.ge.f32.partialorder %v972, 0.0
    %vm1156 = vcmp.ge.f32.partialorder %v974, 0.0
    %vm1157 = vcmp.ge.f32.partialorder %v1085, 0.0
    %vm1158 = vcmp.ge.f32.partialorder %v1087, 0.0
    %vm1159 = vcmp.ge.f32.partialorder %v978, 0.0
    %vm1160 = vcmp.ge.f32.partialorder %v980, 0.0
    %vm1161 = vcmp.ge.f32.partialorder %v1091, 0.0
    %vm1162 = vcmp.ge.f32.partialorder %v1093, 0.0
    %vm1163 = vcmp.ge.f32.partialorder %v982, 0.0
    %vm1164 = vcmp.ge.f32.partialorder %v984, 0.0
    %vm1165 = vcmp.ge.f32.partialorder %v1095, 0.0
    %vm1166 = vcmp.ge.f32.partialorder %v1097, 0.0
    %vm1167 = vcmp.ge.f32.partialorder %v988, 0.0
    %vm1168 = vcmp.ge.f32.partialorder %v990, 0.0
    %vm1169 = vcmp.ge.f32.partialorder %v1101, 0.0
    %vm1170 = vcmp.ge.f32.partialorder %v1103, 0.0
    %vm1171 = vcmp.ge.f32.partialorder %v992, 0.0
    %vm1172 = vcmp.ge.f32.partialorder %v994, 0.0
    %vm1173 = vcmp.ge.f32.partialorder %v1105, 0.0
    %vm1174 = vcmp.ge.f32.partialorder %v1107, 0.0
    %vm1175 = vcmp.ge.f32.partialorder %v998, 0.0
    %vm1176 = vcmp.ge.f32.partialorder %v1000, 0.0
    %vm1177 = vcmp.ge.f32.partialorder %v1111, 0.0
    %vm1178 = vcmp.ge.f32.partialorder %v1113, 0.0
    %vm1179 = vcmp.ge.f32.partialorder %v1002, 0.0
    %vm1180 = vcmp.ge.f32.partialorder %v1004, 0.0
    %vm1181 = vcmp.ge.f32.partialorder %v1115, 0.0
    %vm1182 = vcmp.ge.f32.partialorder %v1117, 0.0
    %v1183 = vmul.f32 %v928, 0.2
    %v1184 = vmul.f32 %v930, 0.2
    %v1185 = vmul.f32 %v1041, 0.2
    %v1186 = vmul.f32 %v1043, 0.2
    %v1187 = vmul.f32 %v932, 0.2
    %v1188 = vmul.f32 %v934, 0.2
    %v1189 = vmul.f32 %v1045, 0.2
    %v1190 = vmul.f32 %v1047, 0.2
    %v1191 = vmul.f32 %v938, 0.2
    %v1192 = vmul.f32 %v940, 0.2
    %v1193 = vmul.f32 %v1051, 0.2
    %v1194 = vmul.f32 %v1053, 0.2
    %v1195 = vmul.f32 %v942, 0.2
    %v1196 = vmul.f32 %v944, 0.2
    %v1197 = vmul.f32 %v1055, 0.2
    %v1198 = vmul.f32 %v1057, 0.2
    %v1199 = vmul.f32 %v948, 0.2
    %v1200 = vmul.f32 %v950, 0.2
    %v1201 = vmul.f32 %v1061, 0.2
    %v1202 = vmul.f32 %v1063, 0.2
    %v1203 = vmul.f32 %v952, 0.2
    %v1204 = vmul.f32 %v954, 0.2
    %v1205 = vmul.f32 %v1065, 0.2
    %v1206 = vmul.f32 %v1067, 0.2
    %v1207 = vmul.f32 %v958, 0.2
    %v1208 = vmul.f32 %v960, 0.2
    %v1209 = vmul.f32 %v1071, 0.2
    %v1210 = vmul.f32 %v1073, 0.2
    %v1211 = vmul.f32 %v962, 0.2
    %v1212 = vmul.f32 %v964, 0.2
    %v1213 = vmul.f32 %v1075, 0.2
    %v1214 = vmul.f32 %v1077, 0.2
    %v1215 = vmul.f32 %v968, 0.2
    %v1216 = vmul.f32 %v970, 0.2
    %v1217 = vmul.f32 %v1081, 0.2
    %v1218 = vmul.f32 %v1083, 0.2
    %v1219 = vmul.f32 %v972, 0.2
    %v1220 = vmul.f32 %v974, 0.2
    %v1221 = vmul.f32 %v1085, 0.2
    %v1222 = vmul.f32 %v1087, 0.2
    %v1223 = vmul.f32 %v978, 0.2
    %v1224 = vmul.f32 %v980, 0.2
    %v1225 = vmul.f32 %v1091, 0.2
    %v1226 = vmul.f32 %v1093, 0.2
    %v1227 = vmul.f32 %v982, 0.2
    %v1228 = vmul.f32 %v984, 0.2
    %v1229 = vmul.f32 %v1095, 0.2
    %v1230 = vmul.f32 %v1097, 0.2
    %v1231 = vmul.f32 %v988, 0.2
    %v1232 = vmul.f32 %v990, 0.2
    %v1233 = vmul.f32 %v1101, 0.2
    %v1234 = vmul.f32 %v1103, 0.2
    %v1235 = vmul.f32 %v992, 0.2
    %v1236 = vmul.f32 %v994, 0.2
    %v1237 = vmul.f32 %v1105, 0.2
    %v1238 = vmul.f32 %v1107, 0.2
    %v1239 = vmul.f32 %v998, 0.2
    %v1240 = vmul.f32 %v1000, 0.2
    %v1241 = vmul.f32 %v1111, 0.2
    %v1242 = vmul.f32 %v1113, 0.2
    %v1243 = vmul.f32 %v1002, 0.2
    %v1244 = vmul.f32 %v1004, 0.2
    %v1245 = vmul.f32 %v1115, 0.2
    %v1246 = vmul.f32 %v1117, 0.2
    %v1247 = vsel %vm1119, %v928, %v1183
    %v1248 = vsel %vm1120, %v930, %v1184
    %v1249 = vsel %vm1121, %v1041, %v1185
    %v1250 = vsel %vm1122, %v1043, %v1186
    %v1251 = vsel %vm1123, %v932, %v1187
    %v1252 = vsel %vm1124, %v934, %v1188
    %v1253 = vsel %vm1125, %v1045, %v1189
    %v1254 = vsel %vm1126, %v1047, %v1190
    %v1255 = vsel %vm1127, %v938, %v1191
    %v1256 = vsel %vm1128, %v940, %v1192
    %v1257 = vsel %vm1129, %v1051, %v1193
    %v1258 = vsel %vm1130, %v1053, %v1194
    %v1259 = vsel %vm1131, %v942, %v1195
    %v1260 = vsel %vm1132, %v944, %v1196
    %v1261 = vsel %vm1133, %v1055, %v1197
    %v1262 = vsel %vm1134, %v1057, %v1198
    %v1263 = vsel %vm1135, %v948, %v1199
    %v1264 = vsel %vm1136, %v950, %v1200
    %v1265 = vsel %vm1137, %v1061, %v1201
    %v1266 = vsel %vm1138, %v1063, %v1202
    %v1267 = vsel %vm1139, %v952, %v1203
    %v1268 = vsel %vm1140, %v954, %v1204
    %v1269 = vsel %vm1141, %v1065, %v1205
    %v1270 = vsel %vm1142, %v1067, %v1206
    %v1271 = vsel %vm1143, %v958, %v1207
    %v1272 = vsel %vm1144, %v960, %v1208
    %v1273 = vsel %vm1145, %v1071, %v1209
    %v1274 = vsel %vm1146, %v1073, %v1210
    %v1275 = vsel %vm1147, %v962, %v1211
    %v1276 = vsel %vm1148, %v964, %v1212
    %v1277 = vsel %vm1149, %v1075, %v1213
    %v1278 = vsel %vm1150, %v1077, %v1214
    %v1279 = vsel %vm1151, %v968, %v1215
    %v1280 = vsel %vm1152, %v970, %v1216
    %v1281 = vsel %vm1153, %v1081, %v1217
    %v1282 = vsel %vm1154, %v1083, %v1218
    %v1283 = vsel %vm1155, %v972, %v1219
    %v1284 = vsel %vm1156, %v974, %v1220
    %v1285 = vsel %vm1157, %v1085, %v1221
    %v1286 = vsel %vm1158, %v1087, %v1222
    %v1287 = vsel %vm1159, %v978, %v1223
    %v1288 = vsel %vm1160, %v980, %v1224
    %v1289 = vsel %vm1161, %v1091, %v1225
    %v1290 = vsel %vm1162, %v1093, %v1226
    %v1291 = vsel %vm1163, %v982, %v1227
    %v1292 = vsel %vm1164, %v984, %v1228
    %v1293 = vsel %vm1165, %v1095, %v1229
    %v1294 = vsel %vm1166, %v1097, %v1230
    %v1295 = vsel %vm1167, %v988, %v1231
    %v1296 = vsel %vm1168, %v990, %v1232
    %v1297 = vsel %vm1169, %v1101, %v1233
    %v1298 = vsel %vm1170, %v1103, %v1234
    %v1299 = vsel %vm1171, %v992, %v1235
    %v1300 = vsel %vm1172, %v994, %v1236
    %v1301 = vsel %vm1173, %v1105, %v1237
    %v1302 = vsel %vm1174, %v1107, %v1238
    %v1303 = vsel %vm1175, %v998, %v1239
    %v1304 = vsel %vm1176, %v1000, %v1240
    %v1305 = vsel %vm1177, %v1111, %v1241
    %v1306 = vsel %vm1178, %v1113, %v1242
    %v1307 = vsel %vm1179, %v1002, %v1243
    %v1308 = vsel %vm1180, %v1004, %v1244
    %v1309 = vsel %vm1181, %v1115, %v1245
    %v1310 = vsel %vm1182, %v1117, %v1246
    %v1311 = vpack.c.bf16 %v1251, %v1247
    %v1312 = vpack.c.bf16 %v1252, %v1248
    %v1313 = vpack.c.bf16 %v1253, %v1249
    %v1314 = vpack.c.bf16 %v1254, %v1250
    %v1315 = vpack.c.bf16 %v1259, %v1255
    %v1316 = vpack.c.bf16 %v1260, %v1256
    %v1317 = vpack.c.bf16 %v1261, %v1257
    %v1318 = vpack.c.bf16 %v1262, %v1258
    %v1319 = vpack.c.bf16 %v1267, %v1263
    %v1320 = vpack.c.bf16 %v1268, %v1264
    %v1321 = vpack.c.bf16 %v1269, %v1265
    %v1322 = vpack.c.bf16 %v1270, %v1266
    %v1323 = vpack.c.bf16 %v1275, %v1271
    %v1324 = vpack.c.bf16 %v1276, %v1272
    %v1325 = vpack.c.bf16 %v1277, %v1273
    %v1326 = vpack.c.bf16 %v1278, %v1274
    %v1327 = vpack.c.bf16 %v1283, %v1279
    %v1328 = vpack.c.bf16 %v1284, %v1280
    %v1329 = vpack.c.bf16 %v1285, %v1281
    %v1330 = vpack.c.bf16 %v1286, %v1282
    %v1331 = vpack.c.bf16 %v1291, %v1287
    %v1332 = vpack.c.bf16 %v1292, %v1288
    %v1333 = vpack.c.bf16 %v1293, %v1289
    %v1334 = vpack.c.bf16 %v1294, %v1290
    %v1335 = vpack.c.bf16 %v1299, %v1295
    %v1336 = vpack.c.bf16 %v1300, %v1296
    %v1337 = vpack.c.bf16 %v1301, %v1297
    %v1338 = vpack.c.bf16 %v1302, %v1298
    %v1339 = vpack.c.bf16 %v1307, %v1303
    %v1340 = vpack.c.bf16 %v1308, %v1304
    %v1341 = vpack.c.bf16 %v1309, %v1305
    %v1342 = vpack.c.bf16 %v1310, %v1306
    %v1343 = vld [vmem:[#allocation8] sm:$0xff]
    %v1344 = vld [vmem:[#allocation8 + $0x8] sm:$0xff]
    %v1345 = vld [vmem:[#allocation8 + $0x10] sm:$0xff]
    %v1346 = vld [vmem:[#allocation8 + $0x18] sm:$0xff]
    %v1347 = vld [vmem:[#allocation8 + $0x20] sm:$0xff]
    %v1348 = vld [vmem:[#allocation8 + $0x28] sm:$0xff]
    %v1349 = vld [vmem:[#allocation8 + $0x30] sm:$0xff]
    %v1350 = vld [vmem:[#allocation8 + $0x38] sm:$0xff]
    %v1351 = vld [vmem:[#allocation8 + $0x40] sm:$0xff]
    %v1352 = vld [vmem:[#allocation8 + $0x48] sm:$0xff]
    %v1353 = vld [vmem:[#allocation8 + $0x50] sm:$0xff]
    %v1354 = vld [vmem:[#allocation8 + $0x58] sm:$0xff]
    %v1355 = vld [vmem:[#allocation8 + $0x60] sm:$0xff]
    %v1356 = vld [vmem:[#allocation8 + $0x68] sm:$0xff]
    %v1357 = vld [vmem:[#allocation8 + $0x70] sm:$0xff]
    %v1358 = vld [vmem:[#allocation8 + $0x78] sm:$0xff]
    %v1359 = vld [vmem:[#allocation8 + $0x80] sm:$0xff]
    %v1360 = vld [vmem:[#allocation8 + $0x88] sm:$0xff]
    %v1361 = vld [vmem:[#allocation8 + $0x90] sm:$0xff]
    %v1362 = vld [vmem:[#allocation8 + $0x98] sm:$0xff]
    %v1363 = vld [vmem:[#allocation8 + $0xa0] sm:$0xff]
    %v1364 = vld [vmem:[#allocation8 + $0xa8] sm:$0xff]
    %v1365 = vld [vmem:[#allocation8 + $0xb0] sm:$0xff]
    %v1366 = vld [vmem:[#allocation8 + $0xb8] sm:$0xff]
    %v1367 = vld [vmem:[#allocation8 + $0xc0] sm:$0xff]
    %v1368 = vld [vmem:[#allocation8 + $0xc8] sm:$0xff]
    %v1369 = vld [vmem:[#allocation8 + $0xd0] sm:$0xff]
    %v1370 = vld [vmem:[#allocation8 + $0xd8] sm:$0xff]
    %v1371 = vld [vmem:[#allocation8 + $0xe0] sm:$0xff]
    %v1372 = vld [vmem:[#allocation8 + $0xe8] sm:$0xff]
    %v1373 = vld [vmem:[#allocation8 + $0xf0] sm:$0xff]
    %v1374 = vld [vmem:[#allocation8 + $0xf8] sm:$0xff]
    %v1375 = vld [vmem:[#allocation8 + $0x100] sm:$0xff]
    %v1376 = vld [vmem:[#allocation8 + $0x108] sm:$0xff]
    %v1377 = vld [vmem:[#allocation8 + $0x110] sm:$0xff]
    %v1378 = vld [vmem:[#allocation8 + $0x118] sm:$0xff]
    %v1379 = vld [vmem:[#allocation8 + $0x120] sm:$0xff]
    %v1380 = vld [vmem:[#allocation8 + $0x128] sm:$0xff]
    %v1381 = vld [vmem:[#allocation8 + $0x130] sm:$0xff]
    %v1382 = vld [vmem:[#allocation8 + $0x138] sm:$0xff]
    %v1383 = vld [vmem:[#allocation8 + $0x140] sm:$0xff]
    %v1384 = vld [vmem:[#allocation8 + $0x148] sm:$0xff]
    %v1385 = vld [vmem:[#allocation8 + $0x150] sm:$0xff]
    %v1386 = vld [vmem:[#allocation8 + $0x158] sm:$0xff]
    %v1387 = vld [vmem:[#allocation8 + $0x160] sm:$0xff]
    %v1388 = vld [vmem:[#allocation8 + $0x168] sm:$0xff]
    %v1389 = vld [vmem:[#allocation8 + $0x170] sm:$0xff]
    %v1390 = vld [vmem:[#allocation8 + $0x178] sm:$0xff]
    %v1391 = vld [vmem:[#allocation8 + $0x180] sm:$0xff]
    %v1392 = vld [vmem:[#allocation8 + $0x188] sm:$0xff]
    %v1393 = vld [vmem:[#allocation8 + $0x190] sm:$0xff]
    %v1394 = vld [vmem:[#allocation8 + $0x198] sm:$0xff]
    %v1395 = vld [vmem:[#allocation8 + $0x1a0] sm:$0xff]
    %v1396 = vld [vmem:[#allocation8 + $0x1a8] sm:$0xff]
    %v1397 = vld [vmem:[#allocation8 + $0x1b0] sm:$0xff]
    %v1398 = vld [vmem:[#allocation8 + $0x1b8] sm:$0xff]
    %v1399 = vld [vmem:[#allocation8 + $0x1c0] sm:$0xff]
    %v1400 = vld [vmem:[#allocation8 + $0x1c8] sm:$0xff]
    %v1401 = vld [vmem:[#allocation8 + $0x1d0] sm:$0xff]
    %v1402 = vld [vmem:[#allocation8 + $0x1d8] sm:$0xff]
    %v1403 = vld [vmem:[#allocation8 + $0x1e0] sm:$0xff]
    %v1404 = vld [vmem:[#allocation8 + $0x1e8] sm:$0xff]
    %v1405 = vld [vmem:[#allocation8 + $0x1f0] sm:$0xff]
    %v1406 = vld [vmem:[#allocation8 + $0x1f8] sm:$0xff]
    %v1407 = vld [vmem:[%s6] sm:$0x3]
    %v1409 = vlaneseq
    %v1410 = vshrl.u32 %v1409, 7
    %v1411 = vsub.s32 0, %v1410
    %v1412 = vrot.slane %v1407, %v1411
    %v1413 = vlaneseq
    %v1414 = vshrl.u32 %v1413, 7
    %v1415 = vsub.s32 1, %v1414
    %v1416 = vrot.slane %v1407, %v1415
    %v1483 = vunpack.c.l.b16 %v1343
    %v1484 = vunpack.c.h.b16 %v1343
    %v1485 = vunpack.c.l.b16 %v1344
    %v1486 = vunpack.c.h.b16 %v1344
    %v1487 = vunpack.c.l.b16 %v1345
    %v1488 = vunpack.c.h.b16 %v1345
    %v1489 = vunpack.c.l.b16 %v1346
    %v1490 = vunpack.c.h.b16 %v1346
    %v1491 = vunpack.c.l.b16 %v1347
    %v1492 = vunpack.c.h.b16 %v1347
    %v1493 = vunpack.c.l.b16 %v1348
    %v1494 = vunpack.c.h.b16 %v1348
    %v1495 = vunpack.c.l.b16 %v1349
    %v1496 = vunpack.c.h.b16 %v1349
    %v1497 = vunpack.c.l.b16 %v1350
    %v1498 = vunpack.c.h.b16 %v1350
    %v1499 = vunpack.c.l.b16 %v1351
    %v1500 = vunpack.c.h.b16 %v1351
    %v1501 = vunpack.c.l.b16 %v1352
    %v1502 = vunpack.c.h.b16 %v1352
    %v1503 = vunpack.c.l.b16 %v1353
    %v1504 = vunpack.c.h.b16 %v1353
    %v1505 = vunpack.c.l.b16 %v1354
    %v1506 = vunpack.c.h.b16 %v1354
    %v1507 = vunpack.c.l.b16 %v1355
    %v1508 = vunpack.c.h.b16 %v1355
    %v1509 = vunpack.c.l.b16 %v1356
    %v1510 = vunpack.c.h.b16 %v1356
    %v1511 = vunpack.c.l.b16 %v1357
    %v1512 = vunpack.c.h.b16 %v1357
    %v1513 = vunpack.c.l.b16 %v1358
    %v1514 = vunpack.c.h.b16 %v1358
    %v1515 = vunpack.c.l.b16 %v1359
    %v1516 = vunpack.c.h.b16 %v1359
    %v1517 = vunpack.c.l.b16 %v1360
    %v1518 = vunpack.c.h.b16 %v1360
    %v1519 = vunpack.c.l.b16 %v1361
    %v1520 = vunpack.c.h.b16 %v1361
    %v1521 = vunpack.c.l.b16 %v1362
    %v1522 = vunpack.c.h.b16 %v1362
    %v1523 = vunpack.c.l.b16 %v1363
    %v1524 = vunpack.c.h.b16 %v1363
    %v1525 = vunpack.c.l.b16 %v1364
    %v1526 = vunpack.c.h.b16 %v1364
    %v1527 = vunpack.c.l.b16 %v1365
    %v1528 = vunpack.c.h.b16 %v1365
    %v1529 = vunpack.c.l.b16 %v1366
    %v1530 = vunpack.c.h.b16 %v1366
    %v1531 = vunpack.c.l.b16 %v1367
    %v1532 = vunpack.c.h.b16 %v1367
    %v1533 = vunpack.c.l.b16 %v1368
    %v1534 = vunpack.c.h.b16 %v1368
    %v1535 = vunpack.c.l.b16 %v1369
    %v1536 = vunpack.c.h.b16 %v1369
    %v1537 = vunpack.c.l.b16 %v1370
    %v1538 = vunpack.c.h.b16 %v1370
    %v1539 = vunpack.c.l.b16 %v1371
    %v1540 = vunpack.c.h.b16 %v1371
    %v1541 = vunpack.c.l.b16 %v1372
    %v1542 = vunpack.c.h.b16 %v1372
    %v1543 = vunpack.c.l.b16 %v1373
    %v1544 = vunpack.c.h.b16 %v1373
    %v1545 = vunpack.c.l.b16 %v1374
    %v1546 = vunpack.c.h.b16 %v1374
    %v1547 = vunpack.c.l.b16 %v1375
    %v1548 = vunpack.c.h.b16 %v1375
    %v1549 = vunpack.c.l.b16 %v1376
    %v1550 = vunpack.c.h.b16 %v1376
    %v1551 = vunpack.c.l.b16 %v1377
    %v1552 = vunpack.c.h.b16 %v1377
    %v1553 = vunpack.c.l.b16 %v1378
    %v1554 = vunpack.c.h.b16 %v1378
    %v1555 = vunpack.c.l.b16 %v1379
    %v1556 = vunpack.c.h.b16 %v1379
    %v1557 = vunpack.c.l.b16 %v1380
    %v1558 = vunpack.c.h.b16 %v1380
    %v1559 = vunpack.c.l.b16 %v1381
    %v1560 = vunpack.c.h.b16 %v1381
    %v1561 = vunpack.c.l.b16 %v1382
    %v1562 = vunpack.c.h.b16 %v1382
    %v1563 = vunpack.c.l.b16 %v1383
    %v1564 = vunpack.c.h.b16 %v1383
    %v1565 = vunpack.c.l.b16 %v1384
    %v1566 = vunpack.c.h.b16 %v1384
    %v1567 = vunpack.c.l.b16 %v1385
    %v1568 = vunpack.c.h.b16 %v1385
    %v1569 = vunpack.c.l.b16 %v1386
    %v1570 = vunpack.c.h.b16 %v1386
    %v1571 = vunpack.c.l.b16 %v1387
    %v1572 = vunpack.c.h.b16 %v1387
    %v1573 = vunpack.c.l.b16 %v1388
    %v1574 = vunpack.c.h.b16 %v1388
    %v1575 = vunpack.c.l.b16 %v1389
    %v1576 = vunpack.c.h.b16 %v1389
    %v1577 = vunpack.c.l.b16 %v1390
    %v1578 = vunpack.c.h.b16 %v1390
    %v1579 = vunpack.c.l.b16 %v1391
    %v1580 = vunpack.c.h.b16 %v1391
    %v1581 = vunpack.c.l.b16 %v1392
    %v1582 = vunpack.c.h.b16 %v1392
    %v1583 = vunpack.c.l.b16 %v1393
    %v1584 = vunpack.c.h.b16 %v1393
    %v1585 = vunpack.c.l.b16 %v1394
    %v1586 = vunpack.c.h.b16 %v1394
    %v1587 = vunpack.c.l.b16 %v1395
    %v1588 = vunpack.c.h.b16 %v1395
    %v1589 = vunpack.c.l.b16 %v1396
    %v1590 = vunpack.c.h.b16 %v1396
    %v1591 = vunpack.c.l.b16 %v1397
    %v1592 = vunpack.c.h.b16 %v1397
    %v1593 = vunpack.c.l.b16 %v1398
    %v1594 = vunpack.c.h.b16 %v1398
    %v1595 = vunpack.c.l.b16 %v1399
    %v1596 = vunpack.c.h.b16 %v1399
    %v1597 = vunpack.c.l.b16 %v1400
    %v1598 = vunpack.c.h.b16 %v1400
    %v1599 = vunpack.c.l.b16 %v1401
    %v1600 = vunpack.c.h.b16 %v1401
    %v1601 = vunpack.c.l.b16 %v1402
    %v1602 = vunpack.c.h.b16 %v1402
    %v1603 = vunpack.c.l.b16 %v1403
    %v1604 = vunpack.c.h.b16 %v1403
    %v1605 = vunpack.c.l.b16 %v1404
    %v1606 = vunpack.c.h.b16 %v1404
    %v1607 = vunpack.c.l.b16 %v1405
    %v1608 = vunpack.c.h.b16 %v1405
    %v1609 = vunpack.c.l.b16 %v1406
    %v1610 = vunpack.c.h.b16 %v1406
    %v1611 = vpack.c.b16 %v1485, %v1483
    %v1612 = vpack.c.b16 %v1486, %v1484
    %v1613 = vpack.c.b16 %v1489, %v1487
    %v1614 = vpack.c.b16 %v1490, %v1488
    %v1615 = vpack.c.b16 %v1493, %v1491
    %v1616 = vpack.c.b16 %v1494, %v1492
    %v1617 = vpack.c.b16 %v1497, %v1495
    %v1618 = vpack.c.b16 %v1498, %v1496
    %v1619 = vpack.c.b16 %v1501, %v1499
    %v1620 = vpack.c.b16 %v1502, %v1500
    %v1621 = vpack.c.b16 %v1505, %v1503
    %v1622 = vpack.c.b16 %v1506, %v1504
    %v1623 = vpack.c.b16 %v1509, %v1507
    %v1624 = vpack.c.b16 %v1510, %v1508
    %v1625 = vpack.c.b16 %v1513, %v1511
    %v1626 = vpack.c.b16 %v1514, %v1512
    %v1627 = vpack.c.b16 %v1517, %v1515
    %v1628 = vpack.c.b16 %v1518, %v1516
    %v1629 = vpack.c.b16 %v1521, %v1519
    %v1630 = vpack.c.b16 %v1522, %v1520
    %v1631 = vpack.c.b16 %v1525, %v1523
    %v1632 = vpack.c.b16 %v1526, %v1524
    %v1633 = vpack.c.b16 %v1529, %v1527
    %v1634 = vpack.c.b16 %v1530, %v1528
    %v1635 = vpack.c.b16 %v1533, %v1531
    %v1636 = vpack.c.b16 %v1534, %v1532
    %v1637 = vpack.c.b16 %v1537, %v1535
    %v1638 = vpack.c.b16 %v1538, %v1536
    %v1639 = vpack.c.b16 %v1541, %v1539
    %v1640 = vpack.c.b16 %v1542, %v1540
    %v1641 = vpack.c.b16 %v1545, %v1543
    %v1642 = vpack.c.b16 %v1546, %v1544
    %v1643 = vpack.c.b16 %v1549, %v1547
    %v1644 = vpack.c.b16 %v1550, %v1548
    %v1645 = vpack.c.b16 %v1553, %v1551
    %v1646 = vpack.c.b16 %v1554, %v1552
    %v1647 = vpack.c.b16 %v1557, %v1555
    %v1648 = vpack.c.b16 %v1558, %v1556
    %v1649 = vpack.c.b16 %v1561, %v1559
    %v1650 = vpack.c.b16 %v1562, %v1560
    %v1651 = vpack.c.b16 %v1565, %v1563
    %v1652 = vpack.c.b16 %v1566, %v1564
    %v1653 = vpack.c.b16 %v1569, %v1567
    %v1654 = vpack.c.b16 %v1570, %v1568
    %v1655 = vpack.c.b16 %v1573, %v1571
    %v1656 = vpack.c.b16 %v1574, %v1572
    %v1657 = vpack.c.b16 %v1577, %v1575
    %v1658 = vpack.c.b16 %v1578, %v1576
    %v1659 = vpack.c.b16 %v1581, %v1579
    %v1660 = vpack.c.b16 %v1582, %v1580
    %v1661 = vpack.c.b16 %v1585, %v1583
    %v1662 = vpack.c.b16 %v1586, %v1584
    %v1663 = vpack.c.b16 %v1589, %v1587
    %v1664 = vpack.c.b16 %v1590, %v1588
    %v1665 = vpack.c.b16 %v1593, %v1591
    %v1666 = vpack.c.b16 %v1594, %v1592
    %v1667 = vpack.c.b16 %v1597, %v1595
    %v1668 = vpack.c.b16 %v1598, %v1596
    %v1669 = vpack.c.b16 %v1601, %v1599
    %v1670 = vpack.c.b16 %v1602, %v1600
    %v1671 = vpack.c.b16 %v1605, %v1603
    %v1672 = vpack.c.b16 %v1606, %v1604
    %v1673 = vpack.c.b16 %v1609, %v1607
    %v1674 = vpack.c.b16 %v1610, %v1608
    %1739 = vmatprep.subr.bf16.mxu0 %v1612
    %1740 = vmatpush1.bf16.msra.mxu0 %v1611
    %1741 = vmatprep.subr.bf16.mxu0 %v1614
    %1742 = vmatpush1.bf16.msra.mxu0 %v1613
    %1743 = vmatprep.subr.bf16.mxu0 %v1616
    %1744 = vmatpush1.bf16.msra.mxu0 %v1615
    %1745 = vmatprep.subr.bf16.mxu0 %v1618
    %1746 = vmatpush1.bf16.msra.mxu0 %v1617
    %1747 = vmatprep.subr.bf16.mxu0 %v1620
    %1748 = vmatpush1.bf16.msra.mxu0 %v1619
    %1749 = vmatprep.subr.bf16.mxu0 %v1622
    %1750 = vmatpush1.bf16.msra.mxu0 %v1621
    %1751 = vmatprep.subr.bf16.mxu0 %v1624
    %1752 = vmatpush1.bf16.msra.mxu0 %v1623
    %1753 = vmatprep.subr.bf16.mxu0 %v1626
    %1754 = vmatpush1.bf16.msra.mxu0 %v1625
    %1755 = vmatprep.subr.bf16.mxu0 %v1628
    %1756 = vmatpush1.bf16.msra.mxu0 %v1627
    %1757 = vmatprep.subr.bf16.mxu0 %v1630
    %1758 = vmatpush1.bf16.msra.mxu0 %v1629
    %1759 = vmatprep.subr.bf16.mxu0 %v1632
    %1760 = vmatpush1.bf16.msra.mxu0 %v1631
    %1761 = vmatprep.subr.bf16.mxu0 %v1634
    %1762 = vmatpush1.bf16.msra.mxu0 %v1633
    %1763 = vmatprep.subr.bf16.mxu0 %v1636
    %1764 = vmatpush1.bf16.msra.mxu0 %v1635
    %1765 = vmatprep.subr.bf16.mxu0 %v1638
    %1766 = vmatpush1.bf16.msra.mxu0 %v1637
    %1767 = vmatprep.subr.bf16.mxu0 %v1640
    %1768 = vmatpush1.bf16.msra.mxu0 %v1639
    %1769 = vmatprep.subr.bf16.mxu0 %v1642
    %1770 = vmatpush1.bf16.msra.mxu0 %v1641
    %1771 = vmatprep.mubr.bf16.mxu0 %v1312
    %1772 = vmatmul.mubr.bf16.gmra.mrb[0].mxu0 %v1311
    %v1773 = vpop.f32.mrb[0].mxu0
    %v1774 = vadd.f32 %v1412, %v1773
    %v1775 = vpop.f32.mrb[0].mxu0
    %v1776 = vadd.f32 %v1416, %v1775
    %v1777 = vpop.f32.mrb[0].mxu0
    %v1778 = vadd.f32 %v1412, %v1777
    %v1779 = vpop.f32.mrb[0].mxu0
    %v1780 = vadd.f32 %v1416, %v1779
    %1781 = vmatprep.mubr.bf16.mxu0 %v1316
    %1782 = vmatmul.mubr.bf16.gmra.mrb[0].mxu0 %v1315
    %v1783 = vpop.f32.mrb[0].mxu0
    %v1784 = vadd.f32 %v1412, %v1783
    %v1785 = vpop.f32.mrb[0].mxu0
    %v1786 = vadd.f32 %v1416, %v1785
    %v1787 = vpop.f32.mrb[0].mxu0
    %v1788 = vadd.f32 %v1412, %v1787
    %v1789 = vpop.f32.mrb[0].mxu0
    %v1790 = vadd.f32 %v1416, %v1789
    %1791 = vmatprep.mubr.bf16.mxu0 %v1320
    %1792 = vmatmul.mubr.bf16.gmra.mrb[0].mxu0 %v1319
    %v1793 = vpop.f32.mrb[0].mxu0
    %v1794 = vadd.f32 %v1412, %v1793
    %v1795 = vpop.f32.mrb[0].mxu0
    %v1796 = vadd.f32 %v1416, %v1795
    %v1797 = vpop.f32.mrb[0].mxu0
    %v1798 = vadd.f32 %v1412, %v1797
    %v1799 = vpop.f32.mrb[0].mxu0
    %v1800 = vadd.f32 %v1416, %v1799
    %1801 = vmatprep.mubr.bf16.mxu0 %v1324
    %1802 = vmatmul.mubr.bf16.gmra.mrb[0].mxu0 %v1323
    %v1803 = vpop.f32.mrb[0].mxu0
    %v1804 = vadd.f32 %v1412, %v1803
    %v1805 = vpop.f32.mrb[0].mxu0
    %v1806 = vadd.f32 %v1416, %v1805
    %v1807 = vpop.f32.mrb[0].mxu0
    %v1808 = vadd.f32 %v1412, %v1807
    %v1809 = vpop.f32.mrb[0].mxu0
    %v1810 = vadd.f32 %v1416, %v1809
    %1811 = vmatprep.mubr.bf16.mxu0 %v1328
    %1812 = vmatmul.mubr.bf16.gmra.mrb[0].mxu0 %v1327
    %v1813 = vpop.f32.mrb[0].mxu0
    %v1814 = vadd.f32 %v1412, %v1813
    %v1815 = vpop.f32.mrb[0].mxu0
    %v1816 = vadd.f32 %v1416, %v1815
    %v1817 = vpop.f32.mrb[0].mxu0
    %v1818 = vadd.f32 %v1412, %v1817
    %v1819 = vpop.f32.mrb[0].mxu0
    %v1820 = vadd.f32 %v1416, %v1819
    %1821 = vmatprep.mubr.bf16.mxu0 %v1332
    %1822 = vmatmul.mubr.bf16.gmra.mrb[0].mxu0 %v1331
    %v1823 = vpop.f32.mrb[0].mxu0
    %v1824 = vadd.f32 %v1412, %v1823
    %v1825 = vpop.f32.mrb[0].mxu0
    %v1826 = vadd.f32 %v1416, %v1825
    %v1827 = vpop.f32.mrb[0].mxu0
    %v1828 = vadd.f32 %v1412, %v1827
    %v1829 = vpop.f32.mrb[0].mxu0
    %v1830 = vadd.f32 %v1416, %v1829
    %1831 = vmatprep.mubr.bf16.mxu0 %v1336
    %1832 = vmatmul.mubr.bf16.gmra.mrb[0].mxu0 %v1335
    %v1833 = vpop.f32.mrb[0].mxu0
    %v1834 = vadd.f32 %v1412, %v1833
    %v1835 = vpop.f32.mrb[0].mxu0
    %v1836 = vadd.f32 %v1416, %v1835
    %v1837 = vpop.f32.mrb[0].mxu0
    %v1838 = vadd.f32 %v1412, %v1837
    %v1839 = vpop.f32.mrb[0].mxu0
    %v1840 = vadd.f32 %v1416, %v1839
    %1841 = vmatprep.mubr.bf16.mxu0 %v1340
    %1842 = vmatmul.mubr.bf16.gmra.mrb[0].mxu0 %v1339
    %v1843 = vpop.f32.mrb[0].mxu0
    %v1844 = vadd.f32 %v1412, %v1843
    %v1845 = vpop.f32.mrb[0].mxu0
    %v1846 = vadd.f32 %v1416, %v1845
    %v1847 = vpop.f32.mrb[0].mxu0
    %v1848 = vadd.f32 %v1412, %v1847
    %v1849 = vpop.f32.mrb[0].mxu0
    %v1850 = vadd.f32 %v1416, %v1849
    %1851 = vdwg.mxu0
    %1852 = vmatprep.subr.bf16.mxu0 %v1644
    %1853 = vmatpush1.bf16.msra.mxu0 %v1643
    %1854 = vmatprep.subr.bf16.mxu0 %v1646
    %1855 = vmatpush1.bf16.msra.mxu0 %v1645
    %1856 = vmatprep.subr.bf16.mxu0 %v1648
    %1857 = vmatpush1.bf16.msra.mxu0 %v1647
    %1858 = vmatprep.subr.bf16.mxu0 %v1650
    %1859 = vmatpush1.bf16.msra.mxu0 %v1649
    %1860 = vmatprep.subr.bf16.mxu0 %v1652
    %1861 = vmatpush1.bf16.msra.mxu0 %v1651
    %1862 = vmatprep.subr.bf16.mxu0 %v1654
    %1863 = vmatpush1.bf16.msra.mxu0 %v1653
    %1864 = vmatprep.subr.bf16.mxu0 %v1656
    %1865 = vmatpush1.bf16.msra.mxu0 %v1655
    %1866 = vmatprep.subr.bf16.mxu0 %v1658
    %1867 = vmatpush1.bf16.msra.mxu0 %v1657
    %1868 = vmatprep.subr.bf16.mxu0 %v1660
    %1869 = vmatpush1.bf16.msra.mxu0 %v1659
    %1870 = vmatprep.subr.bf16.mxu0 %v1662
    %1871 = vmatpush1.bf16.msra.mxu0 %v1661
    %1872 = vmatprep.subr.bf16.mxu0 %v1664
    %1873 = vmatpush1.bf16.msra.mxu0 %v1663
    %1874 = vmatprep.subr.bf16.mxu0 %v1666
    %1875 = vmatpush1.bf16.msra.mxu0 %v1665
    %1876 = vmatprep.subr.bf16.mxu0 %v1668
    %1877 = vmatpush1.bf16.msra.mxu0 %v1667
    %1878 = vmatprep.subr.bf16.mxu0 %v1670
    %1879 = vmatpush1.bf16.msra.mxu0 %v1669
    %1880 = vmatprep.subr.bf16.mxu0 %v1672
    %1881 = vmatpush1.bf16.msra.mxu0 %v1671
    %1882 = vmatprep.subr.bf16.mxu0 %v1674
    %1883 = vmatpush1.bf16.msra.mxu0 %v1673
    %1884 = vmatprep.mubr.bf16.mxu0 %v1314
    %1885 = vmatmul.mubr.bf16.gmra.mrb[0].mxu0 %v1313
    %v1886 = vpop.f32.mrb[0].mxu0
    %v1887 = vadd.f32 %v1774, %v1886
    %v1888 = vpop.f32.mrb[0].mxu0
    %v1889 = vadd.f32 %v1776, %v1888
    %v1890 = vpop.f32.mrb[0].mxu0
    %v1891 = vadd.f32 %v1778, %v1890
    %v1892 = vpop.f32.mrb[0].mxu0
    %v1893 = vadd.f32 %v1780, %v1892
    %1894 = vmatprep.mubr.bf16.mxu0 %v1318
    %1895 = vmatmul.mubr.bf16.gmra.mrb[0].mxu0 %v1317
    %v1896 = vpop.f32.mrb[0].mxu0
    %v1897 = vadd.f32 %v1784, %v1896
    %v1898 = vpop.f32.mrb[0].mxu0
    %v1899 = vadd.f32 %v1786, %v1898
    %v1900 = vpop.f32.mrb[0].mxu0
    %v1901 = vadd.f32 %v1788, %v1900
    %v1902 = vpop.f32.mrb[0].mxu0
    %v1903 = vadd.f32 %v1790, %v1902
    %1904 = vmatprep.mubr.bf16.mxu0 %v1322
    %1905 = vmatmul.mubr.bf16.gmra.mrb[0].mxu0 %v1321
    %v1906 = vpop.f32.mrb[0].mxu0
    %v1907 = vadd.f32 %v1794, %v1906
    %v1908 = vpop.f32.mrb[0].mxu0
    %v1909 = vadd.f32 %v1796, %v1908
    %v1910 = vpop.f32.mrb[0].mxu0
    %v1911 = vadd.f32 %v1798, %v1910
    %v1912 = vpop.f32.mrb[0].mxu0
    %v1913 = vadd.f32 %v1800, %v1912
    %1914 = vmatprep.mubr.bf16.mxu0 %v1326
    %1915 = vmatmul.mubr.bf16.gmra.mrb[0].mxu0 %v1325
    %v1916 = vpop.f32.mrb[0].mxu0
    %v1917 = vadd.f32 %v1804, %v1916
    %v1918 = vpop.f32.mrb[0].mxu0
    %v1919 = vadd.f32 %v1806, %v1918
    %v1920 = vpop.f32.mrb[0].mxu0
    %v1921 = vadd.f32 %v1808, %v1920
    %v1922 = vpop.f32.mrb[0].mxu0
    %v1923 = vadd.f32 %v1810, %v1922
    %1924 = vmatprep.mubr.bf16.mxu0 %v1330
    %1925 = vmatmul.mubr.bf16.gmra.mrb[0].mxu0 %v1329
    %v1926 = vpop.f32.mrb[0].mxu0
    %v1927 = vadd.f32 %v1814, %v1926
    %v1928 = vpop.f32.mrb[0].mxu0
    %v1929 = vadd.f32 %v1816, %v1928
    %v1930 = vpop.f32.mrb[0].mxu0
    %v1931 = vadd.f32 %v1818, %v1930
    %v1932 = vpop.f32.mrb[0].mxu0
    %v1933 = vadd.f32 %v1820, %v1932
    %1934 = vmatprep.mubr.bf16.mxu0 %v1334
    %1935 = vmatmul.mubr.bf16.gmra.mrb[0].mxu0 %v1333
    %v1936 = vpop.f32.mrb[0].mxu0
    %v1937 = vadd.f32 %v1824, %v1936
    %v1938 = vpop.f32.mrb[0].mxu0
    %v1939 = vadd.f32 %v1826, %v1938
    %v1940 = vpop.f32.mrb[0].mxu0
    %v1941 = vadd.f32 %v1828, %v1940
    %v1942 = vpop.f32.mrb[0].mxu0
    %v1943 = vadd.f32 %v1830, %v1942
    %1944 = vmatprep.mubr.bf16.mxu0 %v1338
    %1945 = vmatmul.mubr.bf16.gmra.mrb[0].mxu0 %v1337
    %v1946 = vpop.f32.mrb[0].mxu0
    %v1947 = vadd.f32 %v1834, %v1946
    %v1948 = vpop.f32.mrb[0].mxu0
    %v1949 = vadd.f32 %v1836, %v1948
    %v1950 = vpop.f32.mrb[0].mxu0
    %v1951 = vadd.f32 %v1838, %v1950
    %v1952 = vpop.f32.mrb[0].mxu0
    %v1953 = vadd.f32 %v1840, %v1952
    %1954 = vmatprep.mubr.bf16.mxu0 %v1342
    %1955 = vmatmul.mubr.bf16.gmra.mrb[0].mxu0 %v1341
    %v1956 = vpop.f32.mrb[0].mxu0
    %v1957 = vadd.f32 %v1844, %v1956
    %v1958 = vpop.f32.mrb[0].mxu0
    %v1959 = vadd.f32 %v1846, %v1958
    %v1960 = vpop.f32.mrb[0].mxu0
    %v1961 = vadd.f32 %v1848, %v1960
    %v1962 = vpop.f32.mrb[0].mxu0
    %v1963 = vadd.f32 %v1850, %v1962
    %1964 = vdwg.mxu0
    %vm1965 = vcmp.ge.f32.partialorder %v1887, 0.0
    %vm1966 = vcmp.ge.f32.partialorder %v1889, 0.0
    %vm1967 = vcmp.ge.f32.partialorder %v1891, 0.0
    %vm1968 = vcmp.ge.f32.partialorder %v1893, 0.0
    %vm1969 = vcmp.ge.f32.partialorder %v1897, 0.0
    %vm1970 = vcmp.ge.f32.partialorder %v1899, 0.0
    %vm1971 = vcmp.ge.f32.partialorder %v1901, 0.0
    %vm1972 = vcmp.ge.f32.partialorder %v1903, 0.0
    %vm1973 = vcmp.ge.f32.partialorder %v1907, 0.0
    %vm1974 = vcmp.ge.f32.partialorder %v1909, 0.0
    %vm1975 = vcmp.ge.f32.partialorder %v1911, 0.0
    %vm1976 = vcmp.ge.f32.partialorder %v1913, 0.0
    %vm1977 = vcmp.ge.f32.partialorder %v1917, 0.0
    %vm1978 = vcmp.ge.f32.partialorder %v1919, 0.0
    %vm1979 = vcmp.ge.f32.partialorder %v1921, 0.0
    %vm1980 = vcmp.ge.f32.partialorder %v1923, 0.0
    %vm1981 = vcmp.ge.f32.partialorder %v1927, 0.0
    %vm1982 = vcmp.ge.f32.partialorder %v1929, 0.0
    %vm1983 = vcmp.ge.f32.partialorder %v1931, 0.0
    %vm1984 = vcmp.ge.f32.partialorder %v1933, 0.0
    %vm1985 = vcmp.ge.f32.partialorder %v1937, 0.0
    %vm1986 = vcmp.ge.f32.partialorder %v1939, 0.0
    %vm1987 = vcmp.ge.f32.partialorder %v1941, 0.0
    %vm1988 = vcmp.ge.f32.partialorder %v1943, 0.0
    %vm1989 = vcmp.ge.f32.partialorder %v1947, 0.0
    %vm1990 = vcmp.ge.f32.partialorder %v1949, 0.0
    %vm1991 = vcmp.ge.f32.partialorder %v1951, 0.0
    %vm1992 = vcmp.ge.f32.partialorder %v1953, 0.0
    %vm1993 = vcmp.ge.f32.partialorder %v1957, 0.0
    %vm1994 = vcmp.ge.f32.partialorder %v1959, 0.0
    %vm1995 = vcmp.ge.f32.partialorder %v1961, 0.0
    %vm1996 = vcmp.ge.f32.partialorder %v1963, 0.0
    %v1997 = vmul.f32 %v1887, 0.2
    %v1998 = vmul.f32 %v1889, 0.2
    %v1999 = vmul.f32 %v1891, 0.2
    %v2000 = vmul.f32 %v1893, 0.2
    %v2001 = vmul.f32 %v1897, 0.2
    %v2002 = vmul.f32 %v1899, 0.2
    %v2003 = vmul.f32 %v1901, 0.2
    %v2004 = vmul.f32 %v1903, 0.2
    %v2005 = vmul.f32 %v1907, 0.2
    %v2006 = vmul.f32 %v1909, 0.2
    %v2007 = vmul.f32 %v1911, 0.2
    %v2008 = vmul.f32 %v1913, 0.2
    %v2009 = vmul.f32 %v1917, 0.2
    %v2010 = vmul.f32 %v1919, 0.2
    %v2011 = vmul.f32 %v1921, 0.2
    %v2012 = vmul.f32 %v1923, 0.2
    %v2013 = vmul.f32 %v1927, 0.2
    %v2014 = vmul.f32 %v1929, 0.2
    %v2015 = vmul.f32 %v1931, 0.2
    %v2016 = vmul.f32 %v1933, 0.2
    %v2017 = vmul.f32 %v1937, 0.2
    %v2018 = vmul.f32 %v1939, 0.2
    %v2019 = vmul.f32 %v1941, 0.2
    %v2020 = vmul.f32 %v1943, 0.2
    %v2021 = vmul.f32 %v1947, 0.2
    %v2022 = vmul.f32 %v1949, 0.2
    %v2023 = vmul.f32 %v1951, 0.2
    %v2024 = vmul.f32 %v1953, 0.2
    %v2025 = vmul.f32 %v1957, 0.2
    %v2026 = vmul.f32 %v1959, 0.2
    %v2027 = vmul.f32 %v1961, 0.2
    %v2028 = vmul.f32 %v1963, 0.2
    %v2029 = vsel %vm1965, %v1887, %v1997
    %v2030 = vsel %vm1966, %v1889, %v1998
    %v2031 = vsel %vm1967, %v1891, %v1999
    %v2032 = vsel %vm1968, %v1893, %v2000
    %v2033 = vsel %vm1969, %v1897, %v2001
    %v2034 = vsel %vm1970, %v1899, %v2002
    %v2035 = vsel %vm1971, %v1901, %v2003
    %v2036 = vsel %vm1972, %v1903, %v2004
    %v2037 = vsel %vm1973, %v1907, %v2005
    %v2038 = vsel %vm1974, %v1909, %v2006
    %v2039 = vsel %vm1975, %v1911, %v2007
    %v2040 = vsel %vm1976, %v1913, %v2008
    %v2041 = vsel %vm1977, %v1917, %v2009
    %v2042 = vsel %vm1978, %v1919, %v2010
    %v2043 = vsel %vm1979, %v1921, %v2011
    %v2044 = vsel %vm1980, %v1923, %v2012
    %v2045 = vsel %vm1981, %v1927, %v2013
    %v2046 = vsel %vm1982, %v1929, %v2014
    %v2047 = vsel %vm1983, %v1931, %v2015
    %v2048 = vsel %vm1984, %v1933, %v2016
    %v2049 = vsel %vm1985, %v1937, %v2017
    %v2050 = vsel %vm1986, %v1939, %v2018
    %v2051 = vsel %vm1987, %v1941, %v2019
    %v2052 = vsel %vm1988, %v1943, %v2020
    %v2053 = vsel %vm1989, %v1947, %v2021
    %v2054 = vsel %vm1990, %v1949, %v2022
    %v2055 = vsel %vm1991, %v1951, %v2023
    %v2056 = vsel %vm1992, %v1953, %v2024
    %v2057 = vsel %vm1993, %v1957, %v2025
    %v2058 = vsel %vm1994, %v1959, %v2026
    %v2059 = vsel %vm1995, %v1961, %v2027
    %v2060 = vsel %vm1996, %v1963, %v2028
    %v2061 = vld [vmem:[%s7] sm:$0x3]
    %v2063 = vlaneseq
    %v2064 = vshrl.u32 %v2063, 7
    %v2065 = vsub.s32 0, %v2064
    %v2066 = vrot.slane %v2061, %v2065
    %v2067 = vlaneseq
    %v2068 = vshrl.u32 %v2067, 7
    %v2069 = vsub.s32 1, %v2068
    %v2070 = vrot.slane %v2061, %v2069
    %v2073 = vmul.f32 %v2029, %v2066
    %v2074 = vmul.f32 %v2030, %v2070
    %v2075 = vmul.f32 %v2031, %v2066
    %v2076 = vmul.f32 %v2032, %v2070
    %v2077 = vmul.f32 %v2033, %v2066
    %v2078 = vmul.f32 %v2034, %v2070
    %v2079 = vmul.f32 %v2035, %v2066
    %v2080 = vmul.f32 %v2036, %v2070
    %v2081 = vmul.f32 %v2037, %v2066
    %v2082 = vmul.f32 %v2038, %v2070
    %v2083 = vmul.f32 %v2039, %v2066
    %v2084 = vmul.f32 %v2040, %v2070
    %v2085 = vmul.f32 %v2041, %v2066
    %v2086 = vmul.f32 %v2042, %v2070
    %v2087 = vmul.f32 %v2043, %v2066
    %v2088 = vmul.f32 %v2044, %v2070
    %v2089 = vmul.f32 %v2045, %v2066
    %v2090 = vmul.f32 %v2046, %v2070
    %v2091 = vmul.f32 %v2047, %v2066
    %v2092 = vmul.f32 %v2048, %v2070
    %v2093 = vmul.f32 %v2049, %v2066
    %v2094 = vmul.f32 %v2050, %v2070
    %v2095 = vmul.f32 %v2051, %v2066
    %v2096 = vmul.f32 %v2052, %v2070
    %v2097 = vmul.f32 %v2053, %v2066
    %v2098 = vmul.f32 %v2054, %v2070
    %v2099 = vmul.f32 %v2055, %v2066
    %v2100 = vmul.f32 %v2056, %v2070
    %v2101 = vmul.f32 %v2057, %v2066
    %v2102 = vmul.f32 %v2058, %v2070
    %v2103 = vmul.f32 %v2059, %v2066
    %v2104 = vmul.f32 %v2060, %v2070
    %v2105 = vadd.f32 %v2073, %v2074
    %2106 = vadd.xlane.f32.xlu0 %v2105
    %v2107 = vpop.xlane.xlu0 %2106
    %v2108 = vadd.f32 %v2075, %v2076
    %2109 = vadd.xlane.f32.xlu0 %v2108
    %v2110 = vpop.xlane.xlu0 %2109
    %v2111 = vadd.f32 %v2077, %v2078
    %2112 = vadd.xlane.f32.xlu0 %v2111
    %v2113 = vpop.xlane.xlu0 %2112
    %v2114 = vadd.f32 %v2079, %v2080
    %2115 = vadd.xlane.f32.xlu0 %v2114
    %v2116 = vpop.xlane.xlu0 %2115
    %v2117 = vadd.f32 %v2081, %v2082
    %2118 = vadd.xlane.f32.xlu0 %v2117
    %v2119 = vpop.xlane.xlu0 %2118
    %v2120 = vadd.f32 %v2083, %v2084
    %2121 = vadd.xlane.f32.xlu0 %v2120
    %v2122 = vpop.xlane.xlu0 %2121
    %v2123 = vadd.f32 %v2085, %v2086
    %2124 = vadd.xlane.f32.xlu0 %v2123
    %v2125 = vpop.xlane.xlu0 %2124
    %v2126 = vadd.f32 %v2087, %v2088
    %2127 = vadd.xlane.f32.xlu0 %v2126
    %v2128 = vpop.xlane.xlu0 %2127
    %v2129 = vadd.f32 %v2089, %v2090
    %2130 = vadd.xlane.f32.xlu0 %v2129
    %v2131 = vpop.xlane.xlu0 %2130
    %v2132 = vadd.f32 %v2091, %v2092
    %2133 = vadd.xlane.f32.xlu0 %v2132
    %v2134 = vpop.xlane.xlu0 %2133
    %v2135 = vadd.f32 %v2093, %v2094
    %2136 = vadd.xlane.f32.xlu0 %v2135
    %v2137 = vpop.xlane.xlu0 %2136
    %v2138 = vadd.f32 %v2095, %v2096
    %2139 = vadd.xlane.f32.xlu0 %v2138
    %v2140 = vpop.xlane.xlu0 %2139
    %v2141 = vadd.f32 %v2097, %v2098
    %2142 = vadd.xlane.f32.xlu0 %v2141
    %v2143 = vpop.xlane.xlu0 %2142
    %v2144 = vadd.f32 %v2099, %v2100
    %2145 = vadd.xlane.f32.xlu0 %v2144
    %v2146 = vpop.xlane.xlu0 %2145
    %v2147 = vadd.f32 %v2101, %v2102
    %2148 = vadd.xlane.f32.xlu0 %v2147
    %v2149 = vpop.xlane.xlu0 %2148
    %v2150 = vadd.f32 %v2103, %v2104
    %2151 = vadd.xlane.f32.xlu0 %v2150
    %v2152 = vpop.xlane.xlu0 %2151
    %v2153 = vld [vmem:[#allocation2] sm:$0x1]
    %v2155 = vlaneseq
    %v2156 = vshrl.u32 %v2155, 7
    %v2157 = vsub.s32 0, %v2156
    %v2158 = vrot.slane %v2153, %v2157
    %v2160 = vadd.f32 %v2107, %v2158
    %v2161 = vadd.f32 %v2110, %v2158
    %v2162 = vadd.f32 %v2113, %v2158
    %v2163 = vadd.f32 %v2116, %v2158
    %v2164 = vadd.f32 %v2119, %v2158
    %v2165 = vadd.f32 %v2122, %v2158
    %v2166 = vadd.f32 %v2125, %v2158
    %v2167 = vadd.f32 %v2128, %v2158
    %v2168 = vadd.f32 %v2131, %v2158
    %v2169 = vadd.f32 %v2134, %v2158
    %v2170 = vadd.f32 %v2137, %v2158
    %v2171 = vadd.f32 %v2140, %v2158
    %v2172 = vadd.f32 %v2143, %v2158
    %v2173 = vadd.f32 %v2146, %v2158
    %v2174 = vadd.f32 %v2149, %v2158
    %v2175 = vadd.f32 %v2152, %v2158
    %v2176 = vsub.f32 0.0, %v2160
    %v2177 = vsub.f32 0.0, %v2161
    %v2178 = vsub.f32 0.0, %v2162
    %v2179 = vsub.f32 0.0, %v2163
    %v2180 = vsub.f32 0.0, %v2164
    %v2181 = vsub.f32 0.0, %v2165
    %v2182 = vsub.f32 0.0, %v2166
    %v2183 = vsub.f32 0.0, %v2167
    %v2184 = vsub.f32 0.0, %v2168
    %v2185 = vsub.f32 0.0, %v2169
    %v2186 = vsub.f32 0.0, %v2170
    %v2187 = vsub.f32 0.0, %v2171
    %v2188 = vsub.f32 0.0, %v2172
    %v2189 = vsub.f32 0.0, %v2173
    %v2190 = vsub.f32 0.0, %v2174
    %v2191 = vsub.f32 0.0, %v2175
    %v2192 = vmul.f32 %v2176, 1.442695
    %v2193 = vpow.pop %v2192
    %v2194 = vmul.f32 %v2177, 1.442695
    %v2195 = vpow.pop %v2194
    %v2196 = vmul.f32 %v2178, 1.442695
    %v2197 = vpow.pop %v2196
    %v2198 = vmul.f32 %v2179, 1.442695
    %v2199 = vpow.pop %v2198
    %v2200 = vmul.f32 %v2180, 1.442695
    %v2201 = vpow.pop %v2200
    %v2202 = vmul.f32 %v2181, 1.442695
    %v2203 = vpow.pop %v2202
    %v2204 = vmul.f32 %v2182, 1.442695
    %v2205 = vpow.pop %v2204
    %v2206 = vmul.f32 %v2183, 1.442695
    %v2207 = vpow.pop %v2206
    %v2208 = vmul.f32 %v2184, 1.442695
    %v2209 = vpow.pop %v2208
    %v2210 = vmul.f32 %v2185, 1.442695
    %v2211 = vpow.pop %v2210
    %v2212 = vmul.f32 %v2186, 1.442695
    %v2213 = vpow.pop %v2212
    %v2214 = vmul.f32 %v2187, 1.442695
    %v2215 = vpow.pop %v2214
    %v2216 = vmul.f32 %v2188, 1.442695
    %v2217 = vpow.pop %v2216
    %v2218 = vmul.f32 %v2189, 1.442695
    %v2219 = vpow.pop %v2218
    %v2220 = vmul.f32 %v2190, 1.442695
    %v2221 = vpow.pop %v2220
    %v2222 = vmul.f32 %v2191, 1.442695
    %v2223 = vpow.pop %v2222
    %v2224 = vadd.f32 %v2193, 1.0
    %v2225 = vadd.f32 %v2195, 1.0
    %v2226 = vadd.f32 %v2197, 1.0
    %v2227 = vadd.f32 %v2199, 1.0
    %v2228 = vadd.f32 %v2201, 1.0
    %v2229 = vadd.f32 %v2203, 1.0
    %v2230 = vadd.f32 %v2205, 1.0
    %v2231 = vadd.f32 %v2207, 1.0
    %v2232 = vadd.f32 %v2209, 1.0
    %v2233 = vadd.f32 %v2211, 1.0
    %v2234 = vadd.f32 %v2213, 1.0
    %v2235 = vadd.f32 %v2215, 1.0
    %v2236 = vadd.f32 %v2217, 1.0
    %v2237 = vadd.f32 %v2219, 1.0
    %v2238 = vadd.f32 %v2221, 1.0
    %v2239 = vadd.f32 %v2223, 1.0
    %v2240 = vrcp.pop %v2224
    %v2241 = vrcp.pop %v2225
    %v2242 = vrcp.pop %v2226
    %v2243 = vrcp.pop %v2227
    %v2244 = vrcp.pop %v2228
    %v2245 = vrcp.pop %v2229
    %v2246 = vrcp.pop %v2230
    %v2247 = vrcp.pop %v2231
    %v2248 = vrcp.pop %v2232
    %v2249 = vrcp.pop %v2233
    %v2250 = vrcp.pop %v2234
    %v2251 = vrcp.pop %v2235
    %v2252 = vrcp.pop %v2236
    %v2253 = vrcp.pop %v2237
    %v2254 = vrcp.pop %v2238
    %v2255 = vrcp.pop %v2239
    %vm2256 = vcmask 7168
    %2257 = vst.msk [vmem:[%s9] sm:$0xff] %vm2256, %v2240
    %2258 = vst.msk [vmem:[%s9 + $0x8] sm:$0xff] %vm2256, %v2241
    %2259 = vst.msk [vmem:[%s9 + $0x10] sm:$0xff] %vm2256, %v2242
    %2260 = vst.msk [vmem:[%s9 + $0x18] sm:$0xff] %vm2256, %v2243
    %2261 = vst.msk [vmem:[%s9 + $0x20] sm:$0xff] %vm2256, %v2244
    %2262 = vst.msk [vmem:[%s9 + $0x28] sm:$0xff] %vm2256, %v2245
    %2263 = vst.msk [vmem:[%s9 + $0x30] sm:$0xff] %vm2256, %v2246
    %2264 = vst.msk [vmem:[%s9 + $0x38] sm:$0xff] %vm2256, %v2247
    %2265 = vst.msk [vmem:[%s9 + $0x40] sm:$0xff] %vm2256, %v2248
    %2266 = vst.msk [vmem:[%s9 + $0x48] sm:$0xff] %vm2256, %v2249
    %2267 = vst.msk [vmem:[%s9 + $0x50] sm:$0xff] %vm2256, %v2250
    %2268 = vst.msk [vmem:[%s9 + $0x58] sm:$0xff] %vm2256, %v2251
    %2269 = vst.msk [vmem:[%s9 + $0x60] sm:$0xff] %vm2256, %v2252
    %2270 = vst.msk [vmem:[%s9 + $0x68] sm:$0xff] %vm2256, %v2253
    %2271 = vst.msk [vmem:[%s9 + $0x70] sm:$0xff] %vm2256, %v2254
    %2272 = vst.msk [vmem:[%s9 + $0x78] sm:$0xff] %vm2256, %v2255
    // Predicated region
    $region54: #{tpu_custom_call.1} parent=1 // pred_check
      _
    $region55: #{tpu_custom_call.1} parent=1 // pred_check_branch
      %2274 = sbr.rel (0) target = $region57
    $region56: #{tpu_custom_call.1} parent=1 // pred_region
      _
    $region57: #{tpu_custom_call.1} parent=1 // pred_fallthru
      _
    // Predicated region
    $region58: #{tpu_custom_call.1} parent=1 // pred_check
      _
    $region59: #{tpu_custom_call.1} parent=1 // pred_check_branch
      %2276 = sbr.rel (0) target = $region61
    $region60: #{tpu_custom_call.1} parent=1 // pred_region
      _
    $region61: #{tpu_custom_call.1} parent=1 // pred_fallthru
      _
    %2277 = vsyncpa [#allocation4], 1
    %2278 = vsyncpa [#allocation6], 1
    %2279 = vsyncpa [#allocation9], 1

</llo_original>
